<compile_context>
chip_gen: v6e
topology: v6e:2x2x1
jax: 0.10.0
libtpu: 0.0.40
codegen_flags: <defaults>
</compile_context>

<pallas_src>
import functools

import jax
import jax.numpy as jnp
from jax import lax
from jax.experimental import pallas as pl
from jax.experimental.pallas import tpu as pltpu

KERNEL_SIZE = 5
PAD = KERNEL_SIZE // 2        # 2
LANES = 128


def _round_up(x, m):
    return (x + m - 1) // m * m


def _unroll_for(trip):
    """Unroll factor for a channel loop: full unroll when short, else a
    dividing factor <= 8 so the LLO scheduler sees the body."""
    if trip <= 1:
        return 1
    if trip <= 8:
        return trip
    for u in (8, 7, 6, 5, 4, 3, 2):
        if trip % u == 0:
            return u
    return 8


def _vmem_capacity_bytes():
    try:
        cap = getattr(pltpu.get_tpu_info(), "vmem_capacity_bytes", None)
        if cap:
            return int(cap)
    except Exception:
        pass
    return 64 * 1024 * 1024   # conservative (v7x-sized) fallback


def _spatial_attention_kernel(w_ref, xc_ref, xt_ref, xb_ref, o_ref, map_ref, *,
                              real_w, halo):
    """One (batch, H-tile) grid step.

    w_ref  : SMEM (2*K*K,) f32      conv weights; avg channel pre-scaled by 1/C
    xc_ref : VMEM (1, C, TH, Wp)    center rows of this tile
    xt_ref : VMEM (1, C, halo, Wp)  row band just above the tile (clamped)
    xb_ref : VMEM (1, C, halo, Wp)  row band just below the tile (clamped)
    o_ref  : VMEM (1, C, TH, Wp)
    map_ref: VMEM (2, TH + 2*halo, Wp) f32 scratch:
             rows [0, halo)             channel-reduced top band
             rows [halo, halo+TH)       channel-reduced center rows
             rows [halo+TH, TH+2*halo)  channel-reduced bottom band
             plane 0 = channel sum, plane 1 = channel max.
    """
    K, P = KERNEL_SIZE, PAD
    C = xc_ref.shape[1]
    TH = xc_ref.shape[2]
    Wp = xc_ref.shape[3]
    n_slabs = TH // halo
    cu = _unroll_for(C - 1)

    t = pl.program_id(1)
    n_tiles = pl.num_programs(1)

    # ---- Phase 1: channel sum / max, slab by slab.  The per-slab (sum, max)
    # ---- accumulators stay in vregs; the VMEM scratch is written once/slab.
    def center_slab(si, carry):
        r0 = pl.multiple_of(si * halo, halo)
        rd = pl.multiple_of(si * halo + halo, halo)
        x0 = xc_ref[0, 0, pl.ds(r0, halo), :].astype(jnp.float32)

        def chan_body(c, acc):
            xc = xc_ref[0, c, pl.ds(r0, halo), :].astype(jnp.float32)
            return acc[0] + xc, jnp.maximum(acc[1], xc)

        ssum, smax = lax.fori_loop(1, C, chan_body, (x0, x0), unroll=cu)
        map_ref[0, pl.ds(rd, halo), :] = ssum
        map_ref[1, pl.ds(rd, halo), :] = smax
        return carry

    lax.fori_loop(0, n_slabs, center_slab, 0, unroll=(n_slabs <= 2))

    def band_reduce_store(src_ref, row0):
        x0 = src_ref[0, 0].astype(jnp.float32)

        def chan_body(c, acc):
            xc = src_ref[0, c].astype(jnp.float32)
            return acc[0] + xc, jnp.maximum(acc[1], xc)

        s, m = lax.fori_loop(1, C, chan_body, (x0, x0), unroll=cu)
        map_ref[0, row0:row0 + halo, :] = s
        map_ref[1, row0:row0 + halo, :] = m

    band_reduce_store(xt_ref, 0)
    band_reduce_store(xb_ref, halo + TH)

    # ---- Phase 2: zero the vertical halo at the image top / bottom only
    # ---- (matches the reference conv's zero padding).
    @pl.when(t == 0)
    def _():
        map_ref[:, 0:halo, :] = jnp.zeros((2, halo, Wp), jnp.float32)

    @pl.when(t == n_tiles - 1)
    def _():
        map_ref[:, halo + TH:, :] = jnp.zeros((2, halo, Wp), jnp.float32)

    # ---- Phase 3: 5x5 (2 -> 1) conv.  Accumulate per-kj partial sums first
    # ---- (no rolls), then apply 4 lane rolls + 4 adds, masking lanes whose
    # ---- source column lies outside the real image width.
    s_kj = [None] * K
    for c in range(2):
        for ki in range(K):
            band = map_ref[c, halo - P + ki:halo - P + ki + TH, :]   # (TH, Wp)
            for kj in range(K):
                w = w_ref[c * K * K + ki * K + kj]
                term = w * band
                s_kj[kj] = term if s_kj[kj] is None else s_kj[kj] + term

    need_any_mask = (Wp - real_w) < P
    lane = lax.broadcasted_iota(jnp.int32, (TH, Wp), 1) if need_any_mask else None

    att = s_kj[P]                                    # kj == P: no shift
    for kj in range(K):
        d = kj - P
        if d == 0:
            continue
        tap = pltpu.roll(s_kj[kj], shift=(-d) % Wp, axis=1)
        if (Wp - real_w) < abs(d):
            # Lanes reading past the true image edge (incl. the circular wrap
            # of the roll) must see zero, like the reference conv's padding.
            if d > 0:
                tap = jnp.where(lane < real_w - d, tap, 0.0)
            else:
                tap = jnp.where(lane >= -d, tap, 0.0)
        att = att + tap

    # exp lowers to the EUP; swap in pl.reciprocal(1+exp(-att), approx=True)
    # only if a full-precision divide ever shows up as VPU work in the bundle.
    att = jax.nn.sigmoid(att)                        # (TH, Wp) f32

    # ---- Phase 4: broadcast multiply, re-reading x one channel at a time.
    mu = _unroll_for(C)

    def mul_body(c, carry):
        xc = xc_ref[0, c].astype(jnp.float32)
        o_ref[0, c] = (att * xc).astype(o_ref.dtype)
        return carry

    lax.fori_loop(0, C, mul_body, 0, unroll=mu)


def _choose_tile_h(C, H, W_pad, itemsize, halo, vmem_budget_bytes, n_batch,
                   min_grid_units=2):
    """Largest multiple-of-halo tile height that divides round_up(H, halo),
    fits the VMEM budget, and (when possible) leaves >= min_grid_units grid
    points so both v7x TensorCores get parallel work."""
    h_al = _round_up(H, halo)

    def vmem_need(th):
        blk = C * W_pad * itemsize
        return (4 * th * blk                          # center in + out, 2 bufs each
                + 4 * halo * blk                      # two halo bands, 2 bufs each
                + 2 * (th + 2 * halo) * W_pad * 4     # f32 sum/max map scratch
                + 7 * th * W_pad * 4)                 # conv partial-sum temporaries

    def pick(require_units):
        for th in range(h_al, halo - 1, -halo):
            if h_al % th:
                continue
            if (require_units and th > halo
                    and n_batch * (h_al // th) < min_grid_units):
                continue
            if vmem_need(th) <= vmem_budget_bytes:
                return th
        return None

    th = pick(True)
    if th is None:
        th = pick(False)
    return th if th is not None else halo


def spatial_attention(x, conv_weight, *, tile_h=None,
                      vmem_budget_bytes=None, vmem_limit_bytes=None):
    """x: (N, C, H, W); conv_weight: (1, 2, K, K) (PyTorch OIHW, bias-free)."""
    N, C, H, W = x.shape
    K, P = KERNEL_SIZE, PAD
    assert conv_weight.shape == (1, 2, K, K)

    itemsize = jnp.dtype(x.dtype).itemsize
    # Native sublane packing: f32 -> 8 rows, bf16 -> 16, int8 -> 32.
    halo = max(8, 32 // max(itemsize, 1))

    # Fold the 1/C of the channel mean into the avg-channel conv weights.
    w = conv_weight.astype(jnp.float32).reshape(2, K * K)
    w = w * jnp.array([[1.0 / C], [1.0]], jnp.float32)
    w_flat = w.reshape(-1)

    # Lane-dense width: round up to 128 only; in-kernel lane masks handle the
    # roll wrap when the pad margin is < PAD, so aligned widths pay nothing.
    W_pad = _round_up(max(W, LANES), LANES)

    # Per-generation VMEM sizing (128 MiB physical on v5e/v6e, 64 MiB on v7x).
    phys_vmem = _vmem_capacity_bytes()
    if vmem_budget_bytes is None:
        vmem_budget_bytes = int(phys_vmem * 0.60)
    if vmem_limit_bytes is None:
        vmem_limit_bytes = int(phys_vmem * 0.75)

    if tile_h is None:
        tile_h = _choose_tile_h(C, H, W_pad, itemsize, halo,
                                vmem_budget_bytes, N)
    tile_h = max(halo, _round_up(int(tile_h), halo))
    H_pad = _round_up(H, tile_h)
    n_tiles = H_pad // tile_h
    n_bands = H_pad // halo
    th_bands = tile_h // halo

    x_p = x
    if (H_pad, W_pad) != (H, W):
        # Padded rows / cols are exactly zero so the channel sum / max over
        # them stays 0, matching the reference conv's zero padding.  This HBM
        # round trip is skipped entirely when H, W are already aligned.
        x_p = jnp.pad(x, ((0, 0), (0, 0), (0, H_pad - H), (0, W_pad - W)))

    center_spec = pl.BlockSpec((1, C, tile_h, W_pad), lambda n, t: (n, 0, t, 0))
    top_spec = pl.BlockSpec(
        (1, C, halo, W_pad),
        lambda n, t: (n, 0, jnp.maximum(t * th_bands - 1, 0), 0))
    bot_spec = pl.BlockSpec(
        (1, C, halo, W_pad),
        lambda n, t: (n, 0, jnp.minimum((t + 1) * th_bands, n_bands - 1), 0))

    kernel = functools.partial(_spatial_attention_kernel, real_w=W, halo=halo)

    out_p = pl.pallas_call(
        kernel,
        out_shape=jax.ShapeDtypeStruct((N, C, H_pad, W_pad), x.dtype),
        grid=(N, n_tiles),
        in_specs=[
            pl.BlockSpec(memory_space=pltpu.MemorySpace.SMEM),   # conv weights
            center_spec,                                         # x (center rows)
            top_spec,                                            # x (band above)
            bot_spec,                                            # x (band below)
        ],
        out_specs=center_spec,
        scratch_shapes=[
            pltpu.VMEM((2, tile_h + 2 * halo, W_pad), jnp.float32),
        ],
        compiler_params=pltpu.CompilerParams(
            dimension_semantics=("parallel", "parallel"),
            vmem_limit_bytes=int(vmem_limit_bytes)),
    )(w_flat, x_p, x_p, x_p)

    if (H_pad, W_pad) != (H, W):
        out_p = out_p[:, :, :H, :W]
    return out_p


def _reference(x, conv_weight):
    avg = jnp.mean(x, axis=1, keepdims=True)
    mx = jnp.max(x, axis=1, keepdims=True)
    att = jnp.concatenate([avg, mx], axis=1)
    conv = lax.conv_general_dilated(
        att, conv_weight.astype(att.dtype), window_strides=(1, 1),
        padding=((PAD, PAD), (PAD, PAD)),
        dimension_numbers=("NCHW", "OIHW", "NCHW"),
        precision=lax.Precision.HIGHEST)
    return jax.nn.sigmoid(conv) * x


if __name__ == "__main__":
    key = jax.random.PRNGKey(0)
    kx, kw, kx2 = jax.random.split(key, 3)

    conv_weight = 0.1 * jax.random.normal(
        kw, (1, 2, KERNEL_SIZE, KERNEL_SIZE), dtype=jnp.float32)

    # Case 1: small unaligned image (wrapper pads W -> 128), default tiling.
    x1 = jax.random.normal(kx, (2, 4, 16, 16), dtype=jnp.float32)
    ref1 = _reference(x1, conv_weight)
    out1 = jax.block_until_ready(spatial_attention(x1, conv_weight))
    assert out1.shape == ref1.shape
    assert jnp.allclose(out1, ref1, atol=1e-5, rtol=1e-5), "mismatch (case 1)"

    # Case 2: same input, forced 8-row tiles -> exercises the halo / edge path.
    out2 = jax.block_until_ready(spatial_attention(x1, conv_weight, tile_h=8))
    assert jnp.allclose(out2, ref1, atol=1e-5, rtol=1e-5), "mismatch (case 2)"

    # Case 3: lane-aligned width (W == 128) and H divisible by the chosen tile
    # -> no jnp.pad / slice round trip; exercises the roll-wrap lane masking.
    x3 = jax.random.normal(kx2, (1, 3, 24, 128), dtype=jnp.float32)
    ref3 = _reference(x3, conv_weight)
    out3 = jax.block_until_ready(spatial_attention(x3, conv_weight))
    assert out3.shape == ref3.shape
    assert jnp.allclose(out3, ref3, atol=1e-5, rtol=1e-5), "mismatch (case 3)"

    print("KERNEL_OK")
</pallas_src>

<mosaic_0001>
module attributes {stable_mosaic.version = 11 : i64} {
  func.func @_spatial_attention_kernel(%arg0: i32, %arg1: i32, %arg2: memref<50xf32, #tpu.memory_space<smem>>, %arg3: memref<1x4x16x128xf32, #tpu.memory_space<vmem>>, %arg4: memref<1x4x8x128xf32, #tpu.memory_space<vmem>>, %arg5: memref<1x4x8x128xf32, #tpu.memory_space<vmem>>, %arg6: memref<1x4x16x128xf32, #tpu.memory_space<vmem>>, %arg7: memref<2x32x128xf32, #tpu.memory_space<vmem>>) attributes {dimension_semantics = [#tpu.dimension_semantics<parallel>, #tpu.dimension_semantics<parallel>], iteration_bounds = array<i64: 2, 1>, scalar_prefetch = 0 : i64, scratch_operands = 1 : i64, tpu.core_type = #tpu.core_type<tc>, window_params = [{transform_indices = @transform_0, window_bounds = array<i64: 50>}, {transform_indices = @transform_1, window_bounds = array<i64: 1, 4, 16, 128>}, {transform_indices = @transform_2, window_bounds = array<i64: 1, 4, 8, 128>}, {transform_indices = @transform_3, window_bounds = array<i64: 1, 4, 8, 128>}, {transform_indices = @transform_4, window_bounds = array<i64: 1, 4, 16, 128>}]} {
    %c0_i32 = arith.constant 0 : i32
    %c8_i32 = arith.constant 8 : i32
    %0 = arith.muli %c0_i32, %c8_i32 : i32
    %1 = tpu.assume_multiple %0, 8 : i32
    %c8_i32_0 = arith.constant 8 : i32
    %2 = arith.muli %c0_i32, %c8_i32_0 : i32
    %c8_i32_1 = arith.constant 8 : i32
    %3 = arith.addi %2, %c8_i32_1 : i32
    %4 = tpu.assume_multiple %3, 8 : i32
    %c0 = arith.constant 0 : index
    %c0_2 = arith.constant 0 : index
    %5 = arith.index_cast %1 : i32 to index
    %c0_3 = arith.constant 0 : index
    %6 = vector.load %arg3[%c0, %c0_2, %5, %c0_3] : memref<1x4x16x128xf32, #tpu.memory_space<vmem>>, vector<1x1x8x128xf32>
    %7 = vector.shape_cast %6 : vector<1x1x8x128xf32> to vector<8x128xf32>
    %c1_i32 = arith.constant 1 : i32
    %c0_4 = arith.constant 0 : index
    %8 = arith.index_cast %c1_i32 : i32 to index
    %9 = arith.index_cast %1 : i32 to index
    %c0_5 = arith.constant 0 : index
    %10 = vector.load %arg3[%c0_4, %8, %9, %c0_5] : memref<1x4x16x128xf32, #tpu.memory_space<vmem>>, vector<1x1x8x128xf32>
    %11 = vector.shape_cast %10 : vector<1x1x8x128xf32> to vector<8x128xf32>
    %12 = arith.addf %7, %11 : vector<8x128xf32>
    %13 = arith.maximumf %7, %11 : vector<8x128xf32>
    %c2_i32 = arith.constant 2 : i32
    %c0_6 = arith.constant 0 : index
    %14 = arith.index_cast %c2_i32 : i32 to index
    %15 = arith.index_cast %1 : i32 to index
    %c0_7 = arith.constant 0 : index
    %16 = vector.load %arg3[%c0_6, %14, %15, %c0_7] : memref<1x4x16x128xf32, #tpu.memory_space<vmem>>, vector<1x1x8x128xf32>
    %17 = vector.shape_cast %16 : vector<1x1x8x128xf32> to vector<8x128xf32>
    %18 = arith.addf %12, %17 : vector<8x128xf32>
    %19 = arith.maximumf %13, %17 : vector<8x128xf32>
    %c3_i32 = arith.constant 3 : i32
    %c0_8 = arith.constant 0 : index
    %20 = arith.index_cast %c3_i32 : i32 to index
    %21 = arith.index_cast %1 : i32 to index
    %c0_9 = arith.constant 0 : index
    %22 = vector.load %arg3[%c0_8, %20, %21, %c0_9] : memref<1x4x16x128xf32, #tpu.memory_space<vmem>>, vector<1x1x8x128xf32>
    %23 = vector.shape_cast %22 : vector<1x1x8x128xf32> to vector<8x128xf32>
    %24 = arith.addf %18, %23 : vector<8x128xf32>
    %25 = arith.maximumf %19, %23 : vector<8x128xf32>
    %c3_i32_10 = arith.constant 3 : i32
    %c0_11 = arith.constant 0 : index
    %26 = arith.index_cast %4 : i32 to index
    %c0_12 = arith.constant 0 : index
    %27 = vector.load %arg7[%c0_11, %26, %c0_12] : memref<2x32x128xf32, #tpu.memory_space<vmem>>, vector<1x8x128xf32>
    %28 = vector.shape_cast %27 : vector<1x8x128xf32> to vector<8x128xf32>
    %29 = vector.shape_cast %24 : vector<8x128xf32> to vector<1x8x128xf32>
    tpu.vector_store %arg7[%c0_11, %26, %c0_12], %29 {strides = array<i32>} : memref<2x32x128xf32, #tpu.memory_space<vmem>>, vector<1x8x128xf32>,
    %c1 = arith.constant 1 : index
    %30 = arith.index_cast %4 : i32 to index
    %c0_13 = arith.constant 0 : index
    %31 = vector.load %arg7[%c1, %30, %c0_13] : memref<2x32x128xf32, #tpu.memory_space<vmem>>, vector<1x8x128xf32>
    %32 = vector.shape_cast %31 : vector<1x8x128xf32> to vector<8x128xf32>
    %33 = vector.shape_cast %25 : vector<8x128xf32> to vector<1x8x128xf32>
    tpu.vector_store %arg7[%c1, %30, %c0_13], %33 {strides = array<i32>} : memref<2x32x128xf32, #tpu.memory_space<vmem>>, vector<1x8x128xf32>,
    %c1_i32_14 = arith.constant 1 : i32
    %c8_i32_15 = arith.constant 8 : i32
    %34 = arith.muli %c1_i32_14, %c8_i32_15 : i32
    %35 = tpu.assume_multiple %34, 8 : i32
    %c8_i32_16 = arith.constant 8 : i32
    %36 = arith.muli %c1_i32_14, %c8_i32_16 : i32
    %c8_i32_17 = arith.constant 8 : i32
    %37 = arith.addi %36, %c8_i32_17 : i32
    %38 = tpu.assume_multiple %37, 8 : i32
    %c0_18 = arith.constant 0 : index
    %c0_19 = arith.constant 0 : index
    %39 = arith.index_cast %35 : i32 to index
    %c0_20 = arith.constant 0 : index
    %40 = vector.load %arg3[%c0_18, %c0_19, %39, %c0_20] : memref<1x4x16x128xf32, #tpu.memory_space<vmem>>, vector<1x1x8x128xf32>
    %41 = vector.shape_cast %40 : vector<1x1x8x128xf32> to vector<8x128xf32>
    %c1_i32_21 = arith.constant 1 : i32
    %c0_22 = arith.constant 0 : index
    %42 = arith.index_cast %c1_i32_21 : i32 to index
    %43 = arith.index_cast %35 : i32 to index
    %c0_23 = arith.constant 0 : index
    %44 = vector.load %arg3[%c0_22, %42, %43, %c0_23] : memref<1x4x16x128xf32, #tpu.memory_space<vmem>>, vector<1x1x8x128xf32>
    %45 = vector.shape_cast %44 : vector<1x1x8x128xf32> to vector<8x128xf32>
    %46 = arith.addf %41, %45 : vector<8x128xf32>
    %47 = arith.maximumf %41, %45 : vector<8x128xf32>
    %c2_i32_24 = arith.constant 2 : i32
    %c0_25 = arith.constant 0 : index
    %48 = arith.index_cast %c2_i32_24 : i32 to index
    %49 = arith.index_cast %35 : i32 to index
    %c0_26 = arith.constant 0 : index
    %50 = vector.load %arg3[%c0_25, %48, %49, %c0_26] : memref<1x4x16x128xf32, #tpu.memory_space<vmem>>, vector<1x1x8x128xf32>
    %51 = vector.shape_cast %50 : vector<1x1x8x128xf32> to vector<8x128xf32>
    %52 = arith.addf %46, %51 : vector<8x128xf32>
    %53 = arith.maximumf %47, %51 : vector<8x128xf32>
    %c3_i32_27 = arith.constant 3 : i32
    %c0_28 = arith.constant 0 : index
    %54 = arith.index_cast %c3_i32_27 : i32 to index
    %55 = arith.index_cast %35 : i32 to index
    %c0_29 = arith.constant 0 : index
    %56 = vector.load %arg3[%c0_28, %54, %55, %c0_29] : memref<1x4x16x128xf32, #tpu.memory_space<vmem>>, vector<1x1x8x128xf32>
    %57 = vector.shape_cast %56 : vector<1x1x8x128xf32> to vector<8x128xf32>
    %58 = arith.addf %52, %57 : vector<8x128xf32>
    %59 = arith.maximumf %53, %57 : vector<8x128xf32>
    %c3_i32_30 = arith.constant 3 : i32
    %c0_31 = arith.constant 0 : index
    %60 = arith.index_cast %38 : i32 to index
    %c0_32 = arith.constant 0 : index
    %61 = vector.load %arg7[%c0_31, %60, %c0_32] : memref<2x32x128xf32, #tpu.memory_space<vmem>>, vector<1x8x128xf32>
    %62 = vector.shape_cast %61 : vector<1x8x128xf32> to vector<8x128xf32>
    %63 = vector.shape_cast %58 : vector<8x128xf32> to vector<1x8x128xf32>
    tpu.vector_store %arg7[%c0_31, %60, %c0_32], %63 {strides = array<i32>} : memref<2x32x128xf32, #tpu.memory_space<vmem>>, vector<1x8x128xf32>,
    %c1_33 = arith.constant 1 : index
    %64 = arith.index_cast %38 : i32 to index
    %c0_34 = arith.constant 0 : index
    %65 = vector.load %arg7[%c1_33, %64, %c0_34] : memref<2x32x128xf32, #tpu.memory_space<vmem>>, vector<1x8x128xf32>
    %66 = vector.shape_cast %65 : vector<1x8x128xf32> to vector<8x128xf32>
    %67 = vector.shape_cast %59 : vector<8x128xf32> to vector<1x8x128xf32>
    tpu.vector_store %arg7[%c1_33, %64, %c0_34], %67 {strides = array<i32>} : memref<2x32x128xf32, #tpu.memory_space<vmem>>, vector<1x8x128xf32>,
    %c2_i32_35 = arith.constant 2 : i32
    %c0_36 = arith.constant 0 : index
    %c0_37 = arith.constant 0 : index
    %c0_38 = arith.constant 0 : index
    %c0_39 = arith.constant 0 : index
    %68 = vector.load %arg4[%c0_36, %c0_37, %c0_38, %c0_39] : memref<1x4x8x128xf32, #tpu.memory_space<vmem>>, vector<1x1x8x128xf32>
    %69 = vector.shape_cast %68 : vector<1x1x8x128xf32> to vector<8x128xf32>
    %c1_i32_40 = arith.constant 1 : i32
    %c0_41 = arith.constant 0 : index
    %70 = arith.index_cast %c1_i32_40 : i32 to index
    %c0_42 = arith.constant 0 : index
    %c0_43 = arith.constant 0 : index
    %71 = vector.load %arg4[%c0_41, %70, %c0_42, %c0_43] : memref<1x4x8x128xf32, #tpu.memory_space<vmem>>, vector<1x1x8x128xf32>
    %72 = vector.shape_cast %71 : vector<1x1x8x128xf32> to vector<8x128xf32>
    %73 = arith.addf %69, %72 : vector<8x128xf32>
    %74 = arith.maximumf %69, %72 : vector<8x128xf32>
    %c2_i32_44 = arith.constant 2 : i32
    %c0_45 = arith.constant 0 : index
    %75 = arith.index_cast %c2_i32_44 : i32 to index
    %c0_46 = arith.constant 0 : index
    %c0_47 = arith.constant 0 : index
    %76 = vector.load %arg4[%c0_45, %75, %c0_46, %c0_47] : memref<1x4x8x128xf32, #tpu.memory_space<vmem>>, vector<1x1x8x128xf32>
    %77 = vector.shape_cast %76 : vector<1x1x8x128xf32> to vector<8x128xf32>
    %78 = arith.addf %73, %77 : vector<8x128xf32>
    %79 = arith.maximumf %74, %77 : vector<8x128xf32>
    %c3_i32_48 = arith.constant 3 : i32
    %c0_49 = arith.constant 0 : index
    %80 = arith.index_cast %c3_i32_48 : i32 to index
    %c0_50 = arith.constant 0 : index
    %c0_51 = arith.constant 0 : index
    %81 = vector.load %arg4[%c0_49, %80, %c0_50, %c0_51] : memref<1x4x8x128xf32, #tpu.memory_space<vmem>>, vector<1x1x8x128xf32>
    %82 = vector.shape_cast %81 : vector<1x1x8x128xf32> to vector<8x128xf32>
    %83 = arith.addf %78, %82 : vector<8x128xf32>
    %84 = arith.maximumf %79, %82 : vector<8x128xf32>
    %c3_i32_52 = arith.constant 3 : i32
    %c0_53 = arith.constant 0 : index
    %c0_54 = arith.constant 0 : index
    %c0_55 = arith.constant 0 : index
    %85 = vector.load %arg7[%c0_53, %c0_54, %c0_55] : memref<2x32x128xf32, #tpu.memory_space<vmem>>, vector<1x8x128xf32>
    %86 = vector.shape_cast %85 : vector<1x8x128xf32> to vector<8x128xf32>
    %87 = vector.shape_cast %83 : vector<8x128xf32> to vector<1x8x128xf32>
    tpu.vector_store %arg7[%c0_53, %c0_54, %c0_55], %87 {strides = array<i32>} : memref<2x32x128xf32, #tpu.memory_space<vmem>>, vector<1x8x128xf32>,
    %c1_56 = arith.constant 1 : index
    %c0_57 = arith.constant 0 : index
    %c0_58 = arith.constant 0 : index
    %88 = vector.load %arg7[%c1_56, %c0_57, %c0_58] : memref<2x32x128xf32, #tpu.memory_space<vmem>>, vector<1x8x128xf32>
    %89 = vector.shape_cast %88 : vector<1x8x128xf32> to vector<8x128xf32>
    %90 = vector.shape_cast %84 : vector<8x128xf32> to vector<1x8x128xf32>
    tpu.vector_store %arg7[%c1_56, %c0_57, %c0_58], %90 {strides = array<i32>} : memref<2x32x128xf32, #tpu.memory_space<vmem>>, vector<1x8x128xf32>,
    %c0_59 = arith.constant 0 : index
    %c0_60 = arith.constant 0 : index
    %c0_61 = arith.constant 0 : index
    %c0_62 = arith.constant 0 : index
    %91 = vector.load %arg5[%c0_59, %c0_60, %c0_61, %c0_62] : memref<1x4x8x128xf32, #tpu.memory_space<vmem>>, vector<1x1x8x128xf32>
    %92 = vector.shape_cast %91 : vector<1x1x8x128xf32> to vector<8x128xf32>
    %c1_i32_63 = arith.constant 1 : i32
    %c0_64 = arith.constant 0 : index
    %93 = arith.index_cast %c1_i32_63 : i32 to index
    %c0_65 = arith.constant 0 : index
    %c0_66 = arith.constant 0 : index
    %94 = vector.load %arg5[%c0_64, %93, %c0_65, %c0_66] : memref<1x4x8x128xf32, #tpu.memory_space<vmem>>, vector<1x1x8x128xf32>
    %95 = vector.shape_cast %94 : vector<1x1x8x128xf32> to vector<8x128xf32>
    %96 = arith.addf %92, %95 : vector<8x128xf32>
    %97 = arith.maximumf %92, %95 : vector<8x128xf32>
    %c2_i32_67 = arith.constant 2 : i32
    %c0_68 = arith.constant 0 : index
    %98 = arith.index_cast %c2_i32_67 : i32 to index
    %c0_69 = arith.constant 0 : index
    %c0_70 = arith.constant 0 : index
    %99 = vector.load %arg5[%c0_68, %98, %c0_69, %c0_70] : memref<1x4x8x128xf32, #tpu.memory_space<vmem>>, vector<1x1x8x128xf32>
    %100 = vector.shape_cast %99 : vector<1x1x8x128xf32> to vector<8x128xf32>
    %101 = arith.addf %96, %100 : vector<8x128xf32>
    %102 = arith.maximumf %97, %100 : vector<8x128xf32>
    %c3_i32_71 = arith.constant 3 : i32
    %c0_72 = arith.constant 0 : index
    %103 = arith.index_cast %c3_i32_71 : i32 to index
    %c0_73 = arith.constant 0 : index
    %c0_74 = arith.constant 0 : index
    %104 = vector.load %arg5[%c0_72, %103, %c0_73, %c0_74] : memref<1x4x8x128xf32, #tpu.memory_space<vmem>>, vector<1x1x8x128xf32>
    %105 = vector.shape_cast %104 : vector<1x1x8x128xf32> to vector<8x128xf32>
    %106 = arith.addf %101, %105 : vector<8x128xf32>
    %107 = arith.maximumf %102, %105 : vector<8x128xf32>
    %c3_i32_75 = arith.constant 3 : i32
    %c0_76 = arith.constant 0 : index
    %c24 = arith.constant 24 : index
    %c0_77 = arith.constant 0 : index
    %108 = vector.load %arg7[%c0_76, %c24, %c0_77] : memref<2x32x128xf32, #tpu.memory_space<vmem>>, vector<1x8x128xf32>
    %109 = vector.shape_cast %108 : vector<1x8x128xf32> to vector<8x128xf32>
    %110 = vector.shape_cast %106 : vector<8x128xf32> to vector<1x8x128xf32>
    tpu.vector_store %arg7[%c0_76, %c24, %c0_77], %110 {strides = array<i32>} : memref<2x32x128xf32, #tpu.memory_space<vmem>>, vector<1x8x128xf32>,
    %c1_78 = arith.constant 1 : index
    %c24_79 = arith.constant 24 : index
    %c0_80 = arith.constant 0 : index
    %111 = vector.load %arg7[%c1_78, %c24_79, %c0_80] : memref<2x32x128xf32, #tpu.memory_space<vmem>>, vector<1x8x128xf32>
    %112 = vector.shape_cast %111 : vector<1x8x128xf32> to vector<8x128xf32>
    %113 = vector.shape_cast %107 : vector<8x128xf32> to vector<1x8x128xf32>
    tpu.vector_store %arg7[%c1_78, %c24_79, %c0_80], %113 {strides = array<i32>} : memref<2x32x128xf32, #tpu.memory_space<vmem>>, vector<1x8x128xf32>,
    %c0_i32_81 = arith.constant 0 : i32
    %114 = arith.cmpi eq, %arg1, %c0_i32_81 : i32
    %115 = arith.extui %114 : i1 to i32
    %c0_i32_82 = arith.constant 0 : i32
    %116 = arith.cmpi ne, %115, %c0_i32_82 : i32
    scf.if %116 {
      %cst_148 = arith.constant 0.000000e+00 : f32
      %380 = vector.broadcast %cst_148 : f32 to vector<2x8x128xf32>
      %c0_149 = arith.constant 0 : index
      %c0_150 = arith.constant 0 : index
      %c0_151 = arith.constant 0 : index
      %381 = vector.load %arg7[%c0_149, %c0_150, %c0_151] : memref<2x32x128xf32, #tpu.memory_space<vmem>>, vector<2x8x128xf32>
      tpu.vector_store %arg7[%c0_149, %c0_150, %c0_151], %380 {strides = array<i32>} : memref<2x32x128xf32, #tpu.memory_space<vmem>>, vector<2x8x128xf32>,
    } else {
    }
    %c0_i32_83 = arith.constant 0 : i32
    %117 = arith.cmpi eq, %arg1, %c0_i32_83 : i32
    %118 = arith.extui %117 : i1 to i32
    %c0_i32_84 = arith.constant 0 : i32
    %119 = arith.cmpi ne, %118, %c0_i32_84 : i32
    scf.if %119 {
      %cst_148 = arith.constant 0.000000e+00 : f32
      %380 = vector.broadcast %cst_148 : f32 to vector<2x8x128xf32>
      %c0_149 = arith.constant 0 : index
      %c24_150 = arith.constant 24 : index
      %c0_151 = arith.constant 0 : index
      %381 = vector.load %arg7[%c0_149, %c24_150, %c0_151] : memref<2x32x128xf32, #tpu.memory_space<vmem>>, vector<2x8x128xf32>
      tpu.vector_store %arg7[%c0_149, %c24_150, %c0_151], %380 {strides = array<i32>} : memref<2x32x128xf32, #tpu.memory_space<vmem>>, vector<2x8x128xf32>,
    } else {
    }
    %c0_85 = arith.constant 0 : index
    %c6 = arith.constant 6 : index
    %c0_86 = arith.constant 0 : index
    %120 = vector.load %arg7[%c0_85, %c6, %c0_86] : memref<2x32x128xf32, #tpu.memory_space<vmem>>, vector<1x16x128xf32>
    %121 = vector.shape_cast %120 : vector<1x16x128xf32> to vector<16x128xf32>
    %c0_87 = arith.constant 0 : index
    %122 = memref.load %arg2[%c0_87] : memref<50xf32, #tpu.memory_space<smem>>
    %123 = vector.broadcast %122 : f32 to vector<16x128xf32>
    %124 = arith.mulf %123, %121 : vector<16x128xf32>
    %c1_88 = arith.constant 1 : index
    %125 = memref.load %arg2[%c1_88] : memref<50xf32, #tpu.memory_space<smem>>
    %126 = vector.broadcast %125 : f32 to vector<16x128xf32>
    %127 = arith.mulf %126, %121 : vector<16x128xf32>
    %c2 = arith.constant 2 : index
    %128 = memref.load %arg2[%c2] : memref<50xf32, #tpu.memory_space<smem>>
    %129 = vector.broadcast %128 : f32 to vector<16x128xf32>
    %130 = arith.mulf %129, %121 : vector<16x128xf32>
    %c3 = arith.constant 3 : index
    %131 = memref.load %arg2[%c3] : memref<50xf32, #tpu.memory_space<smem>>
    %132 = vector.broadcast %131 : f32 to vector<16x128xf32>
    %133 = arith.mulf %132, %121 : vector<16x128xf32>
    %c4 = arith.constant 4 : index
    %134 = memref.load %arg2[%c4] : memref<50xf32, #tpu.memory_space<smem>>
    %135 = vector.broadcast %134 : f32 to vector<16x128xf32>
    %136 = arith.mulf %135, %121 : vector<16x128xf32>
    %c0_89 = arith.constant 0 : index
    %c7 = arith.constant 7 : index
    %c0_90 = arith.constant 0 : index
    %137 = vector.load %arg7[%c0_89, %c7, %c0_90] : memref<2x32x128xf32, #tpu.memory_space<vmem>>, vector<1x16x128xf32>
    %138 = vector.shape_cast %137 : vector<1x16x128xf32> to vector<16x128xf32>
    %c5 = arith.constant 5 : index
    %139 = memref.load %arg2[%c5] : memref<50xf32, #tpu.memory_space<smem>>
    %140 = vector.broadcast %139 : f32 to vector<16x128xf32>
    %141 = arith.mulf %140, %138 : vector<16x128xf32>
    %142 = arith.addf %124, %141 : vector<16x128xf32>
    %c6_91 = arith.constant 6 : index
    %143 = memref.load %arg2[%c6_91] : memref<50xf32, #tpu.memory_space<smem>>
    %144 = vector.broadcast %143 : f32 to vector<16x128xf32>
    %145 = arith.mulf %144, %138 : vector<16x128xf32>
    %146 = arith.addf %127, %145 : vector<16x128xf32>
    %c7_92 = arith.constant 7 : index
    %147 = memref.load %arg2[%c7_92] : memref<50xf32, #tpu.memory_space<smem>>
    %148 = vector.broadcast %147 : f32 to vector<16x128xf32>
    %149 = arith.mulf %148, %138 : vector<16x128xf32>
    %150 = arith.addf %130, %149 : vector<16x128xf32>
    %c8 = arith.constant 8 : index
    %151 = memref.load %arg2[%c8] : memref<50xf32, #tpu.memory_space<smem>>
    %152 = vector.broadcast %151 : f32 to vector<16x128xf32>
    %153 = arith.mulf %152, %138 : vector<16x128xf32>
    %154 = arith.addf %133, %153 : vector<16x128xf32>
    %c9 = arith.constant 9 : index
    %155 = memref.load %arg2[%c9] : memref<50xf32, #tpu.memory_space<smem>>
    %156 = vector.broadcast %155 : f32 to vector<16x128xf32>
    %157 = arith.mulf %156, %138 : vector<16x128xf32>
    %158 = arith.addf %136, %157 : vector<16x128xf32>
    %c0_93 = arith.constant 0 : index
    %c8_94 = arith.constant 8 : index
    %c0_95 = arith.constant 0 : index
    %159 = vector.load %arg7[%c0_93, %c8_94, %c0_95] : memref<2x32x128xf32, #tpu.memory_space<vmem>>, vector<1x16x128xf32>
    %160 = vector.shape_cast %159 : vector<1x16x128xf32> to vector<16x128xf32>
    %c10 = arith.constant 10 : index
    %161 = memref.load %arg2[%c10] : memref<50xf32, #tpu.memory_space<smem>>
    %162 = vector.broadcast %161 : f32 to vector<16x128xf32>
    %163 = arith.mulf %162, %160 : vector<16x128xf32>
    %164 = arith.addf %142, %163 : vector<16x128xf32>
    %c11 = arith.constant 11 : index
    %165 = memref.load %arg2[%c11] : memref<50xf32, #tpu.memory_space<smem>>
    %166 = vector.broadcast %165 : f32 to vector<16x128xf32>
    %167 = arith.mulf %166, %160 : vector<16x128xf32>
    %168 = arith.addf %146, %167 : vector<16x128xf32>
    %c12 = arith.constant 12 : index
    %169 = memref.load %arg2[%c12] : memref<50xf32, #tpu.memory_space<smem>>
    %170 = vector.broadcast %169 : f32 to vector<16x128xf32>
    %171 = arith.mulf %170, %160 : vector<16x128xf32>
    %172 = arith.addf %150, %171 : vector<16x128xf32>
    %c13 = arith.constant 13 : index
    %173 = memref.load %arg2[%c13] : memref<50xf32, #tpu.memory_space<smem>>
    %174 = vector.broadcast %173 : f32 to vector<16x128xf32>
    %175 = arith.mulf %174, %160 : vector<16x128xf32>
    %176 = arith.addf %154, %175 : vector<16x128xf32>
    %c14 = arith.constant 14 : index
    %177 = memref.load %arg2[%c14] : memref<50xf32, #tpu.memory_space<smem>>
    %178 = vector.broadcast %177 : f32 to vector<16x128xf32>
    %179 = arith.mulf %178, %160 : vector<16x128xf32>
    %180 = arith.addf %158, %179 : vector<16x128xf32>
    %c0_96 = arith.constant 0 : index
    %c9_97 = arith.constant 9 : index
    %c0_98 = arith.constant 0 : index
    %181 = vector.load %arg7[%c0_96, %c9_97, %c0_98] : memref<2x32x128xf32, #tpu.memory_space<vmem>>, vector<1x16x128xf32>
    %182 = vector.shape_cast %181 : vector<1x16x128xf32> to vector<16x128xf32>
    %c15 = arith.constant 15 : index
    %183 = memref.load %arg2[%c15] : memref<50xf32, #tpu.memory_space<smem>>
    %184 = vector.broadcast %183 : f32 to vector<16x128xf32>
    %185 = arith.mulf %184, %182 : vector<16x128xf32>
    %186 = arith.addf %164, %185 : vector<16x128xf32>
    %c16 = arith.constant 16 : index
    %187 = memref.load %arg2[%c16] : memref<50xf32, #tpu.memory_space<smem>>
    %188 = vector.broadcast %187 : f32 to vector<16x128xf32>
    %189 = arith.mulf %188, %182 : vector<16x128xf32>
    %190 = arith.addf %168, %189 : vector<16x128xf32>
    %c17 = arith.constant 17 : index
    %191 = memref.load %arg2[%c17] : memref<50xf32, #tpu.memory_space<smem>>
    %192 = vector.broadcast %191 : f32 to vector<16x128xf32>
    %193 = arith.mulf %192, %182 : vector<16x128xf32>
    %194 = arith.addf %172, %193 : vector<16x128xf32>
    %c18 = arith.constant 18 : index
    %195 = memref.load %arg2[%c18] : memref<50xf32, #tpu.memory_space<smem>>
    %196 = vector.broadcast %195 : f32 to vector<16x128xf32>
    %197 = arith.mulf %196, %182 : vector<16x128xf32>
    %198 = arith.addf %176, %197 : vector<16x128xf32>
    %c19 = arith.constant 19 : index
    %199 = memref.load %arg2[%c19] : memref<50xf32, #tpu.memory_space<smem>>
    %200 = vector.broadcast %199 : f32 to vector<16x128xf32>
    %201 = arith.mulf %200, %182 : vector<16x128xf32>
    %202 = arith.addf %180, %201 : vector<16x128xf32>
    %c0_99 = arith.constant 0 : index
    %c10_100 = arith.constant 10 : index
    %c0_101 = arith.constant 0 : index
    %203 = vector.load %arg7[%c0_99, %c10_100, %c0_101] : memref<2x32x128xf32, #tpu.memory_space<vmem>>, vector<1x16x128xf32>
    %204 = vector.shape_cast %203 : vector<1x16x128xf32> to vector<16x128xf32>
    %c20 = arith.constant 20 : index
    %205 = memref.load %arg2[%c20] : memref<50xf32, #tpu.memory_space<smem>>
    %206 = vector.broadcast %205 : f32 to vector<16x128xf32>
    %207 = arith.mulf %206, %204 : vector<16x128xf32>
    %208 = arith.addf %186, %207 : vector<16x128xf32>
    %c21 = arith.constant 21 : index
    %209 = memref.load %arg2[%c21] : memref<50xf32, #tpu.memory_space<smem>>
    %210 = vector.broadcast %209 : f32 to vector<16x128xf32>
    %211 = arith.mulf %210, %204 : vector<16x128xf32>
    %212 = arith.addf %190, %211 : vector<16x128xf32>
    %c22 = arith.constant 22 : index
    %213 = memref.load %arg2[%c22] : memref<50xf32, #tpu.memory_space<smem>>
    %214 = vector.broadcast %213 : f32 to vector<16x128xf32>
    %215 = arith.mulf %214, %204 : vector<16x128xf32>
    %216 = arith.addf %194, %215 : vector<16x128xf32>
    %c23 = arith.constant 23 : index
    %217 = memref.load %arg2[%c23] : memref<50xf32, #tpu.memory_space<smem>>
    %218 = vector.broadcast %217 : f32 to vector<16x128xf32>
    %219 = arith.mulf %218, %204 : vector<16x128xf32>
    %220 = arith.addf %198, %219 : vector<16x128xf32>
    %c24_102 = arith.constant 24 : index
    %221 = memref.load %arg2[%c24_102] : memref<50xf32, #tpu.memory_space<smem>>
    %222 = vector.broadcast %221 : f32 to vector<16x128xf32>
    %223 = arith.mulf %222, %204 : vector<16x128xf32>
    %224 = arith.addf %202, %223 : vector<16x128xf32>
    %c1_103 = arith.constant 1 : index
    %c6_104 = arith.constant 6 : index
    %c0_105 = arith.constant 0 : index
    %225 = vector.load %arg7[%c1_103, %c6_104, %c0_105] : memref<2x32x128xf32, #tpu.memory_space<vmem>>, vector<1x16x128xf32>
    %226 = vector.shape_cast %225 : vector<1x16x128xf32> to vector<16x128xf32>
    %c25 = arith.constant 25 : index
    %227 = memref.load %arg2[%c25] : memref<50xf32, #tpu.memory_space<smem>>
    %228 = vector.broadcast %227 : f32 to vector<16x128xf32>
    %229 = arith.mulf %228, %226 : vector<16x128xf32>
    %230 = arith.addf %208, %229 : vector<16x128xf32>
    %c26 = arith.constant 26 : index
    %231 = memref.load %arg2[%c26] : memref<50xf32, #tpu.memory_space<smem>>
    %232 = vector.broadcast %231 : f32 to vector<16x128xf32>
    %233 = arith.mulf %232, %226 : vector<16x128xf32>
    %234 = arith.addf %212, %233 : vector<16x128xf32>
    %c27 = arith.constant 27 : index
    %235 = memref.load %arg2[%c27] : memref<50xf32, #tpu.memory_space<smem>>
    %236 = vector.broadcast %235 : f32 to vector<16x128xf32>
    %237 = arith.mulf %236, %226 : vector<16x128xf32>
    %238 = arith.addf %216, %237 : vector<16x128xf32>
    %c28 = arith.constant 28 : index
    %239 = memref.load %arg2[%c28] : memref<50xf32, #tpu.memory_space<smem>>
    %240 = vector.broadcast %239 : f32 to vector<16x128xf32>
    %241 = arith.mulf %240, %226 : vector<16x128xf32>
    %242 = arith.addf %220, %241 : vector<16x128xf32>
    %c29 = arith.constant 29 : index
    %243 = memref.load %arg2[%c29] : memref<50xf32, #tpu.memory_space<smem>>
    %244 = vector.broadcast %243 : f32 to vector<16x128xf32>
    %245 = arith.mulf %244, %226 : vector<16x128xf32>
    %246 = arith.addf %224, %245 : vector<16x128xf32>
    %c1_106 = arith.constant 1 : index
    %c7_107 = arith.constant 7 : index
    %c0_108 = arith.constant 0 : index
    %247 = vector.load %arg7[%c1_106, %c7_107, %c0_108] : memref<2x32x128xf32, #tpu.memory_space<vmem>>, vector<1x16x128xf32>
    %248 = vector.shape_cast %247 : vector<1x16x128xf32> to vector<16x128xf32>
    %c30 = arith.constant 30 : index
    %249 = memref.load %arg2[%c30] : memref<50xf32, #tpu.memory_space<smem>>
    %250 = vector.broadcast %249 : f32 to vector<16x128xf32>
    %251 = arith.mulf %250, %248 : vector<16x128xf32>
    %252 = arith.addf %230, %251 : vector<16x128xf32>
    %c31 = arith.constant 31 : index
    %253 = memref.load %arg2[%c31] : memref<50xf32, #tpu.memory_space<smem>>
    %254 = vector.broadcast %253 : f32 to vector<16x128xf32>
    %255 = arith.mulf %254, %248 : vector<16x128xf32>
    %256 = arith.addf %234, %255 : vector<16x128xf32>
    %c32 = arith.constant 32 : index
    %257 = memref.load %arg2[%c32] : memref<50xf32, #tpu.memory_space<smem>>
    %258 = vector.broadcast %257 : f32 to vector<16x128xf32>
    %259 = arith.mulf %258, %248 : vector<16x128xf32>
    %260 = arith.addf %238, %259 : vector<16x128xf32>
    %c33 = arith.constant 33 : index
    %261 = memref.load %arg2[%c33] : memref<50xf32, #tpu.memory_space<smem>>
    %262 = vector.broadcast %261 : f32 to vector<16x128xf32>
    %263 = arith.mulf %262, %248 : vector<16x128xf32>
    %264 = arith.addf %242, %263 : vector<16x128xf32>
    %c34 = arith.constant 34 : index
    %265 = memref.load %arg2[%c34] : memref<50xf32, #tpu.memory_space<smem>>
    %266 = vector.broadcast %265 : f32 to vector<16x128xf32>
    %267 = arith.mulf %266, %248 : vector<16x128xf32>
    %268 = arith.addf %246, %267 : vector<16x128xf32>
    %c1_109 = arith.constant 1 : index
    %c8_110 = arith.constant 8 : index
    %c0_111 = arith.constant 0 : index
    %269 = vector.load %arg7[%c1_109, %c8_110, %c0_111] : memref<2x32x128xf32, #tpu.memory_space<vmem>>, vector<1x16x128xf32>
    %270 = vector.shape_cast %269 : vector<1x16x128xf32> to vector<16x128xf32>
    %c35 = arith.constant 35 : index
    %271 = memref.load %arg2[%c35] : memref<50xf32, #tpu.memory_space<smem>>
    %272 = vector.broadcast %271 : f32 to vector<16x128xf32>
    %273 = arith.mulf %272, %270 : vector<16x128xf32>
    %274 = arith.addf %252, %273 : vector<16x128xf32>
    %c36 = arith.constant 36 : index
    %275 = memref.load %arg2[%c36] : memref<50xf32, #tpu.memory_space<smem>>
    %276 = vector.broadcast %275 : f32 to vector<16x128xf32>
    %277 = arith.mulf %276, %270 : vector<16x128xf32>
    %278 = arith.addf %256, %277 : vector<16x128xf32>
    %c37 = arith.constant 37 : index
    %279 = memref.load %arg2[%c37] : memref<50xf32, #tpu.memory_space<smem>>
    %280 = vector.broadcast %279 : f32 to vector<16x128xf32>
    %281 = arith.mulf %280, %270 : vector<16x128xf32>
    %282 = arith.addf %260, %281 : vector<16x128xf32>
    %c38 = arith.constant 38 : index
    %283 = memref.load %arg2[%c38] : memref<50xf32, #tpu.memory_space<smem>>
    %284 = vector.broadcast %283 : f32 to vector<16x128xf32>
    %285 = arith.mulf %284, %270 : vector<16x128xf32>
    %286 = arith.addf %264, %285 : vector<16x128xf32>
    %c39 = arith.constant 39 : index
    %287 = memref.load %arg2[%c39] : memref<50xf32, #tpu.memory_space<smem>>
    %288 = vector.broadcast %287 : f32 to vector<16x128xf32>
    %289 = arith.mulf %288, %270 : vector<16x128xf32>
    %290 = arith.addf %268, %289 : vector<16x128xf32>
    %c1_112 = arith.constant 1 : index
    %c9_113 = arith.constant 9 : index
    %c0_114 = arith.constant 0 : index
    %291 = vector.load %arg7[%c1_112, %c9_113, %c0_114] : memref<2x32x128xf32, #tpu.memory_space<vmem>>, vector<1x16x128xf32>
    %292 = vector.shape_cast %291 : vector<1x16x128xf32> to vector<16x128xf32>
    %c40 = arith.constant 40 : index
    %293 = memref.load %arg2[%c40] : memref<50xf32, #tpu.memory_space<smem>>
    %294 = vector.broadcast %293 : f32 to vector<16x128xf32>
    %295 = arith.mulf %294, %292 : vector<16x128xf32>
    %296 = arith.addf %274, %295 : vector<16x128xf32>
    %c41 = arith.constant 41 : index
    %297 = memref.load %arg2[%c41] : memref<50xf32, #tpu.memory_space<smem>>
    %298 = vector.broadcast %297 : f32 to vector<16x128xf32>
    %299 = arith.mulf %298, %292 : vector<16x128xf32>
    %300 = arith.addf %278, %299 : vector<16x128xf32>
    %c42 = arith.constant 42 : index
    %301 = memref.load %arg2[%c42] : memref<50xf32, #tpu.memory_space<smem>>
    %302 = vector.broadcast %301 : f32 to vector<16x128xf32>
    %303 = arith.mulf %302, %292 : vector<16x128xf32>
    %304 = arith.addf %282, %303 : vector<16x128xf32>
    %c43 = arith.constant 43 : index
    %305 = memref.load %arg2[%c43] : memref<50xf32, #tpu.memory_space<smem>>
    %306 = vector.broadcast %305 : f32 to vector<16x128xf32>
    %307 = arith.mulf %306, %292 : vector<16x128xf32>
    %308 = arith.addf %286, %307 : vector<16x128xf32>
    %c44 = arith.constant 44 : index
    %309 = memref.load %arg2[%c44] : memref<50xf32, #tpu.memory_space<smem>>
    %310 = vector.broadcast %309 : f32 to vector<16x128xf32>
    %311 = arith.mulf %310, %292 : vector<16x128xf32>
    %312 = arith.addf %290, %311 : vector<16x128xf32>
    %c1_115 = arith.constant 1 : index
    %c10_116 = arith.constant 10 : index
    %c0_117 = arith.constant 0 : index
    %313 = vector.load %arg7[%c1_115, %c10_116, %c0_117] : memref<2x32x128xf32, #tpu.memory_space<vmem>>, vector<1x16x128xf32>
    %314 = vector.shape_cast %313 : vector<1x16x128xf32> to vector<16x128xf32>
    %c45 = arith.constant 45 : index
    %315 = memref.load %arg2[%c45] : memref<50xf32, #tpu.memory_space<smem>>
    %316 = vector.broadcast %315 : f32 to vector<16x128xf32>
    %317 = arith.mulf %316, %314 : vector<16x128xf32>
    %318 = arith.addf %296, %317 : vector<16x128xf32>
    %c46 = arith.constant 46 : index
    %319 = memref.load %arg2[%c46] : memref<50xf32, #tpu.memory_space<smem>>
    %320 = vector.broadcast %319 : f32 to vector<16x128xf32>
    %321 = arith.mulf %320, %314 : vector<16x128xf32>
    %322 = arith.addf %300, %321 : vector<16x128xf32>
    %c47 = arith.constant 47 : index
    %323 = memref.load %arg2[%c47] : memref<50xf32, #tpu.memory_space<smem>>
    %324 = vector.broadcast %323 : f32 to vector<16x128xf32>
    %325 = arith.mulf %324, %314 : vector<16x128xf32>
    %326 = arith.addf %304, %325 : vector<16x128xf32>
    %c48 = arith.constant 48 : index
    %327 = memref.load %arg2[%c48] : memref<50xf32, #tpu.memory_space<smem>>
    %328 = vector.broadcast %327 : f32 to vector<16x128xf32>
    %329 = arith.mulf %328, %314 : vector<16x128xf32>
    %330 = arith.addf %308, %329 : vector<16x128xf32>
    %c49 = arith.constant 49 : index
    %331 = memref.load %arg2[%c49] : memref<50xf32, #tpu.memory_space<smem>>
    %332 = vector.broadcast %331 : f32 to vector<16x128xf32>
    %333 = arith.mulf %332, %314 : vector<16x128xf32>
    %334 = arith.addf %312, %333 : vector<16x128xf32>
    %c2_i32_118 = arith.constant 2 : i32
    %335 = tpu.dynamic_rotate %318 by %c2_i32_118 dim 1 : vector<16x128xf32>, i32 -> vector<16x128xf32>
    %336 = arith.addf %326, %335 : vector<16x128xf32>
    %c1_i32_119 = arith.constant 1 : i32
    %337 = tpu.dynamic_rotate %322 by %c1_i32_119 dim 1 : vector<16x128xf32>, i32 -> vector<16x128xf32>
    %338 = arith.addf %336, %337 : vector<16x128xf32>
    %c127_i32 = arith.constant 127 : i32
    %339 = tpu.dynamic_rotate %330 by %c127_i32 dim 1 : vector<16x128xf32>, i32 -> vector<16x128xf32>
    %340 = arith.addf %338, %339 : vector<16x128xf32>
    %c126_i32 = arith.constant 126 : i32
    %341 = tpu.dynamic_rotate %334 by %c126_i32 dim 1 : vector<16x128xf32>, i32 -> vector<16x128xf32>
    %342 = arith.addf %340, %341 : vector<16x128xf32>
    %343 = arith.negf %342 : vector<16x128xf32>
    %344 = math.exp %343 : vector<16x128xf32>
    %cst = arith.constant 1.000000e+00 : f32
    %345 = vector.broadcast %cst : f32 to vector<16x128xf32>
    %346 = arith.addf %345, %344 : vector<16x128xf32>
    %347 = arith.divf %345, %346 : vector<16x128xf32>
    %c0_i32_120 = arith.constant 0 : i32
    %c0_121 = arith.constant 0 : index
    %348 = arith.index_cast %c0_i32_120 : i32 to index
    %c0_122 = arith.constant 0 : index
    %c0_123 = arith.constant 0 : index
    %349 = vector.load %arg3[%c0_121, %348, %c0_122, %c0_123] : memref<1x4x16x128xf32, #tpu.memory_space<vmem>>, vector<1x1x16x128xf32>
    %350 = vector.shape_cast %349 : vector<1x1x16x128xf32> to vector<16x128xf32>
    %351 = arith.mulf %347, %350 : vector<16x128xf32>
    %c0_124 = arith.constant 0 : index
    %352 = arith.index_cast %c0_i32_120 : i32 to index
    %c0_125 = arith.constant 0 : index
    %c0_126 = arith.constant 0 : index
    %353 = vector.load %arg6[%c0_124, %352, %c0_125, %c0_126] : memref<1x4x16x128xf32, #tpu.memory_space<vmem>>, vector<1x1x16x128xf32>
    %354 = vector.shape_cast %353 : vector<1x1x16x128xf32> to vector<16x128xf32>
    %355 = vector.shape_cast %351 : vector<16x128xf32> to vector<1x1x16x128xf32>
    tpu.vector_store %arg6[%c0_124, %352, %c0_125, %c0_126], %355 {strides = array<i32>} : memref<1x4x16x128xf32, #tpu.memory_space<vmem>>, vector<1x1x16x128xf32>,
    %c1_i32_127 = arith.constant 1 : i32
    %c0_128 = arith.constant 0 : index
    %356 = arith.index_cast %c1_i32_127 : i32 to index
    %c0_129 = arith.constant 0 : index
    %c0_130 = arith.constant 0 : index
    %357 = vector.load %arg3[%c0_128, %356, %c0_129, %c0_130] : memref<1x4x16x128xf32, #tpu.memory_space<vmem>>, vector<1x1x16x128xf32>
    %358 = vector.shape_cast %357 : vector<1x1x16x128xf32> to vector<16x128xf32>
    %359 = arith.mulf %347, %358 : vector<16x128xf32>
    %c0_131 = arith.constant 0 : index
    %360 = arith.index_cast %c1_i32_127 : i32 to index
    %c0_132 = arith.constant 0 : index
    %c0_133 = arith.constant 0 : index
    %361 = vector.load %arg6[%c0_131, %360, %c0_132, %c0_133] : memref<1x4x16x128xf32, #tpu.memory_space<vmem>>, vector<1x1x16x128xf32>
    %362 = vector.shape_cast %361 : vector<1x1x16x128xf32> to vector<16x128xf32>
    %363 = vector.shape_cast %359 : vector<16x128xf32> to vector<1x1x16x128xf32>
    tpu.vector_store %arg6[%c0_131, %360, %c0_132, %c0_133], %363 {strides = array<i32>} : memref<1x4x16x128xf32, #tpu.memory_space<vmem>>, vector<1x1x16x128xf32>,
    %c2_i32_134 = arith.constant 2 : i32
    %c0_135 = arith.constant 0 : index
    %364 = arith.index_cast %c2_i32_134 : i32 to index
    %c0_136 = arith.constant 0 : index
    %c0_137 = arith.constant 0 : index
    %365 = vector.load %arg3[%c0_135, %364, %c0_136, %c0_137] : memref<1x4x16x128xf32, #tpu.memory_space<vmem>>, vector<1x1x16x128xf32>
    %366 = vector.shape_cast %365 : vector<1x1x16x128xf32> to vector<16x128xf32>
    %367 = arith.mulf %347, %366 : vector<16x128xf32>
    %c0_138 = arith.constant 0 : index
    %368 = arith.index_cast %c2_i32_134 : i32 to index
    %c0_139 = arith.constant 0 : index
    %c0_140 = arith.constant 0 : index
    %369 = vector.load %arg6[%c0_138, %368, %c0_139, %c0_140] : memref<1x4x16x128xf32, #tpu.memory_space<vmem>>, vector<1x1x16x128xf32>
    %370 = vector.shape_cast %369 : vector<1x1x16x128xf32> to vector<16x128xf32>
    %371 = vector.shape_cast %367 : vector<16x128xf32> to vector<1x1x16x128xf32>
    tpu.vector_store %arg6[%c0_138, %368, %c0_139, %c0_140], %371 {strides = array<i32>} : memref<1x4x16x128xf32, #tpu.memory_space<vmem>>, vector<1x1x16x128xf32>,
    %c3_i32_141 = arith.constant 3 : i32
    %c0_142 = arith.constant 0 : index
    %372 = arith.index_cast %c3_i32_141 : i32 to index
    %c0_143 = arith.constant 0 : index
    %c0_144 = arith.constant 0 : index
    %373 = vector.load %arg3[%c0_142, %372, %c0_143, %c0_144] : memref<1x4x16x128xf32, #tpu.memory_space<vmem>>, vector<1x1x16x128xf32>
    %374 = vector.shape_cast %373 : vector<1x1x16x128xf32> to vector<16x128xf32>
    %375 = arith.mulf %347, %374 : vector<16x128xf32>
    %c0_145 = arith.constant 0 : index
    %376 = arith.index_cast %c3_i32_141 : i32 to index
    %c0_146 = arith.constant 0 : index
    %c0_147 = arith.constant 0 : index
    %377 = vector.load %arg6[%c0_145, %376, %c0_146, %c0_147] : memref<1x4x16x128xf32, #tpu.memory_space<vmem>>, vector<1x1x16x128xf32>
    %378 = vector.shape_cast %377 : vector<1x1x16x128xf32> to vector<16x128xf32>
    %379 = vector.shape_cast %375 : vector<16x128xf32> to vector<1x1x16x128xf32>
    tpu.vector_store %arg6[%c0_145, %376, %c0_146, %c0_147], %379 {strides = array<i32>} : memref<1x4x16x128xf32, #tpu.memory_space<vmem>>, vector<1x1x16x128xf32>,
    %c4_i32 = arith.constant 4 : i32
    return
  }
  func.func @transform_0(%arg0: i32, %arg1: i32) -> i32 {
    %c0_i32 = arith.constant 0 : i32
    %c0_i32_0 = arith.constant 0 : i32
    return %c0_i32 : i32
  }
  func.func @transform_1(%arg0: i32, %arg1: i32) -> (i32, i32, i32, i32) {
    %c0_i32 = arith.constant 0 : i32
    %c0_i32_0 = arith.constant 0 : i32
    %c0_i32_1 = arith.constant 0 : i32
    return %arg0, %c0_i32, %arg1, %c0_i32_0 : i32, i32, i32, i32
  }
  func.func @transform_2(%arg0: i32, %arg1: i32) -> (i32, i32, i32, i32) {
    %c2_i32 = arith.constant 2 : i32
    %0 = arith.muli %arg1, %c2_i32 : i32
    %c1_i32 = arith.constant 1 : i32
    %1 = arith.subi %0, %c1_i32 : i32
    %c0_i32 = arith.constant 0 : i32
    %2 = arith.maxsi %1, %c0_i32 : i32
    %c0_i32_0 = arith.constant 0 : i32
    %c0_i32_1 = arith.constant 0 : i32
    %c0_i32_2 = arith.constant 0 : i32
    return %arg0, %c0_i32_0, %2, %c0_i32_1 : i32, i32, i32, i32
  }
  func.func @transform_3(%arg0: i32, %arg1: i32) -> (i32, i32, i32, i32) {
    %c1_i32 = arith.constant 1 : i32
    %0 = arith.addi %arg1, %c1_i32 : i32
    %c2_i32 = arith.constant 2 : i32
    %1 = arith.muli %0, %c2_i32 : i32
    %c1_i32_0 = arith.constant 1 : i32
    %2 = arith.minsi %1, %c1_i32_0 : i32
    %c0_i32 = arith.constant 0 : i32
    %c0_i32_1 = arith.constant 0 : i32
    %c0_i32_2 = arith.constant 0 : i32
    return %arg0, %c0_i32, %2, %c0_i32_1 : i32, i32, i32, i32
  }
  func.func @transform_4(%arg0: i32, %arg1: i32) -> (i32, i32, i32, i32) {
    %c0_i32 = arith.constant 0 : i32
    %c0_i32_0 = arith.constant 0 : i32
    %c0_i32_1 = arith.constant 0 : i32
    return %arg0, %c0_i32, %arg1, %c0_i32_0 : i32, i32, i32, i32
  }
}

</mosaic_0001>

<llo_original>
// kernel: tpu_custom_call.1
$region0: #{tpu_custom_call.1}
  #allocation0 [shape = 'u32[]', space=smem, size = 0x4, offset = 0x4, fixed_abs, tag = 'smem constant byte address 0x4 - core index']
  #allocation1 [shape = 'u32[144,128]{1,0:T(1,128)}', space=vmem, size = 0x12000, scoped, tag = 'internal scratch']
  #allocation2 [shape = 'f32[2,32,128]{2,1,0:T(8,128)}', space=vmem, size = 0x8000, scoped, tag = 'scratch operand']
  %s0 = inlined_call_operand.hbm [shape: f32[50], index: 0, kind: input, shape index: {}]
  %s1 = inlined_call_operand.hbm [shape: f32[2,4,16,128], index: 1, kind: input, shape index: {}]
  %s2 = inlined_call_operand.hbm [shape: f32[2,4,16,128], index: 2, kind: input, shape index: {}]
  %s3 = inlined_call_operand.hbm [shape: f32[2,4,16,128], index: 3, kind: input, shape index: {}]
  %s4 = inlined_call_operand.hbm [shape: f32[2,4,16,128], index: 4, kind: output, shape index: {}]
  %s5 = sld [smem:[#allocation0]]
  $region69: #{tpu_custom_call.1} parent=0
    _
  %s7 = ssub.s32 1, %s5
  %s8 = scalar_select 0, %s7, %s5
  $region1: #{tpu_custom_call.1} parent=0
    #allocation3 [shape = 'u8[512]{0}', space=smem, size = 0x200, scoped, tag = 'input window, operand 0, single buffered']
    #allocation4 [shape = 's32[2]{0}', space=sflag, size = 0x8, scoped, tag = 'scoped memory for tpu_custom_call.1']
    #allocation5 [shape = 's32[2]{0}', space=sflag, size = 0x8, scoped, tag = 'scoped memory for tpu_custom_call.1']
    #allocation6 [shape = 's32[2]{0}', space=sflag, size = 0x8, scoped, tag = 'scoped memory for tpu_custom_call.1']
    #allocation7 [shape = 'u8[65536]{0}', space=vmem, size = 0x10000, scoped, tag = 'input window, operand 1']
    #allocation8 [shape = 'u8[32768]{0}', space=vmem, size = 0x8000, scoped, tag = 'input window, operand 2']
    #allocation9 [shape = 's32[2]{0}', space=sflag, size = 0x8, scoped, tag = 'scoped memory for tpu_custom_call.1']
    #allocation10 [shape = 'u8[32768]{0}', space=vmem, size = 0x8000, scoped, tag = 'input window, operand 3']
    #allocation11 [shape = 'u8[65536]{0}', space=vmem, size = 0x10000, scoped, tag = 'output window, operand 0']
    %9 = vsyncpa [#allocation6], 0
    %10 = vsyncpa [#allocation4], 0
    %s11 = scalar_lea.sflag [#allocation4], 1
    %12 = vsyncpa %s11, 0
    %13 = vsyncpa [#allocation9], 0
    %s14 = scalar_lea.sflag [#allocation9], 1
    %15 = vsyncpa %s14, 0
    %16 = vsyncpa [#allocation5], 0
    %s17 = scalar_lea.sflag [#allocation5], 1
    %18 = vsyncpa %s17, 0
    loop: start=0, step=1, limit=4
    $region2: #{tpu_custom_call.1} parent=1 // loop_pre_header
      _
    $region3: #{tpu_custom_call.1} parent=1 // loop_header
      %s20 = sphi 0, %s24
      %p21 = scmp.ge.s32.totalorder %s20, 4
      %s27 = sphi 0, %s39
      %s28 = sphi 0, %s35
      %s29 = sphi 0, %s27
      %s30 = sphi 0, %s28
      %s31 = sphi 0, %s29
      %s32 = sphi 0, %s30
      %s40 = sphi 0, %s40
      %s42 = sphi 0, %s40
      %s43 = sphi 0, %s42
      %s57 = sphi 0, %s43
      %s65 = sphi 0, %s67
      %s68 = sphi 0, %s65
      %s69 = sphi 0, %s68
      %s85 = sphi 0, %s69
      %s101 = sphi 0, %s103
      %s104 = sphi 0, %s101
      %s105 = sphi 0, %s104
      %s121 = sphi 0, %s105
      %s137 = sphi 0, %s139
      %s140 = sphi 0, %s137
      %s141 = sphi 0, %s140
      %s157 = sphi 0, %s141
      %s165 = sphi 0, %s167
      %s168 = sphi 0, %s165
      %s169 = sphi 0, %s168
      %s185 = sphi 0, %s169
    $region4: #{tpu_custom_call.1} parent=1 // loop_header_branch
      %23 = sbr.rel (%p21) target = $region8
    $region5: #{tpu_custom_call.1} parent=1 // loop_body
      %s25 = ssub.s32 %s20, 1
      %s26 = ssub.s32 %s20, 2
      %s33 = sadd.s32 1, %s28
      %p34 = scmp.ge.s32.totalorder %s33, 1
      %s35 = scalar_select %p34, 0, %s33
      %s36 = sadd.s32 1, %s27
      %s37 = scalar_select %p34, %s36, %s27
      %p38 = scmp.ge.s32.totalorder %s37, 2
      %s39 = scalar_select %p38, 0, %s37
      %s41 = sadd.s32 %s40, 1
      %p44 = scmp.eq.s32.totalorder %s20, 1
      %p45 = scmp.ne.s32.totalorder %s40, %s42
      %p46 = scmp.eq.s32.totalorder %s20, 0
      %p47 = por %p45, %p46
      %p48 = scmp.ne.s32.totalorder %s40, %s42
      %p49 = scmp.eq.s32.totalorder %s25, 1
      %p50 = por %p48, %p49
      %p51 = scmp.ne.s32.totalorder %s42, %s43
      %p52 = scmp.eq.s32.totalorder %s25, 0
      %p53 = por %p51, %p52
      %p54 = scmp.ne.s32.totalorder %s42, %s43
      %p55 = scmp.eq.s32.totalorder %s26, 1
      %p56 = por %p54, %p55
      %p58 = scmp.ne.s32.totalorder %s43, %s57
      %p59 = scmp.eq.s32.totalorder %s26, 0
      %p60 = por %p58, %p59
      %s61 = ssub.s32 %s27, %s39
      %s62 = ssub.s32 %s28, %s35
      %s63 = sor.u32 %s61, %s62
      %p64 = scmp.eq.s32.totalorder %s63, 0
      %s66 = sadd.s32 %s65, 1
      %s67 = scalar_select %p64, %s65, %s66
      %p70 = pneg %p64
      %p71 = scmp.eq.s32.totalorder %s20, 1
      %p72 = por %p70, %p71
      %p73 = scmp.ne.s32.totalorder %s65, %s68
      %p74 = scmp.eq.s32.totalorder %s20, 0
      %p75 = por %p73, %p74
      %p76 = scmp.ne.s32.totalorder %s65, %s68
      %p77 = scmp.eq.s32.totalorder %s25, 1
      %p78 = por %p76, %p77
      %p79 = scmp.ne.s32.totalorder %s68, %s69
      %p80 = scmp.eq.s32.totalorder %s25, 0
      %p81 = por %p79, %p80
      %p82 = scmp.ne.s32.totalorder %s68, %s69
      %p83 = scmp.eq.s32.totalorder %s26, 1
      %p84 = por %p82, %p83
      %p86 = scmp.ne.s32.totalorder %s69, %s85
      %p87 = scmp.eq.s32.totalorder %s26, 0
      %p88 = por %p86, %p87
      %s89 = smul.u32 %s28, 2
      %s90 = ssub.s32 %s89, 1
      %p91 = scmp.gt.s32.totalorder %s90, 0
      %s92 = scalar_select %p91, %s90, 0
      %s93 = smul.u32 %s35, 2
      %s94 = ssub.s32 %s93, 1
      %p95 = scmp.gt.s32.totalorder %s94, 0
      %s96 = scalar_select %p95, %s94, 0
      %s97 = ssub.s32 %s27, %s39
      %s98 = ssub.s32 %s92, %s96
      %s99 = sor.u32 %s97, %s98
      %p100 = scmp.eq.s32.totalorder %s99, 0
      %s102 = sadd.s32 %s101, 1
      %s103 = scalar_select %p100, %s101, %s102
      %p106 = pneg %p100
      %p107 = scmp.eq.s32.totalorder %s20, 1
      %p108 = por %p106, %p107
      %p109 = scmp.ne.s32.totalorder %s101, %s104
      %p110 = scmp.eq.s32.totalorder %s20, 0
      %p111 = por %p109, %p110
      %p112 = scmp.ne.s32.totalorder %s101, %s104
      %p113 = scmp.eq.s32.totalorder %s25, 1
      %p114 = por %p112, %p113
      %p115 = scmp.ne.s32.totalorder %s104, %s105
      %p116 = scmp.eq.s32.totalorder %s25, 0
      %p117 = por %p115, %p116
      %p118 = scmp.ne.s32.totalorder %s104, %s105
      %p119 = scmp.eq.s32.totalorder %s26, 1
      %p120 = por %p118, %p119
      %p122 = scmp.ne.s32.totalorder %s105, %s121
      %p123 = scmp.eq.s32.totalorder %s26, 0
      %p124 = por %p122, %p123
      %s125 = sadd.s32 %s28, 1
      %s126 = smul.u32 %s125, 2
      %p127 = scmp.lt.s32.totalorder %s126, 1
      %s128 = scalar_select %p127, %s126, 1
      %s129 = sadd.s32 %s35, 1
      %s130 = smul.u32 %s129, 2
      %p131 = scmp.lt.s32.totalorder %s130, 1
      %s132 = scalar_select %p131, %s130, 1
      %s133 = ssub.s32 %s27, %s39
      %s134 = ssub.s32 %s128, %s132
      %s135 = sor.u32 %s133, %s134
      %p136 = scmp.eq.s32.totalorder %s135, 0
      %s138 = sadd.s32 %s137, 1
      %s139 = scalar_select %p136, %s137, %s138
      %p142 = pneg %p136
      %p143 = scmp.eq.s32.totalorder %s20, 1
      %p144 = por %p142, %p143
      %p145 = scmp.ne.s32.totalorder %s137, %s140
      %p146 = scmp.eq.s32.totalorder %s20, 0
      %p147 = por %p145, %p146
      %p148 = scmp.ne.s32.totalorder %s137, %s140
      %p149 = scmp.eq.s32.totalorder %s25, 1
      %p150 = por %p148, %p149
      %p151 = scmp.ne.s32.totalorder %s140, %s141
      %p152 = scmp.eq.s32.totalorder %s25, 0
      %p153 = por %p151, %p152
      %p154 = scmp.ne.s32.totalorder %s140, %s141
      %p155 = scmp.eq.s32.totalorder %s26, 1
      %p156 = por %p154, %p155
      %p158 = scmp.ne.s32.totalorder %s141, %s157
      %p159 = scmp.eq.s32.totalorder %s26, 0
      %p160 = por %p158, %p159
      %s161 = ssub.s32 %s27, %s39
      %s162 = ssub.s32 %s28, %s35
      %s163 = sor.u32 %s161, %s162
      %p164 = scmp.eq.s32.totalorder %s163, 0
      %s166 = sadd.s32 %s165, 1
      %s167 = scalar_select %p164, %s165, %s166
      %p170 = pneg %p164
      %p171 = scmp.eq.s32.totalorder %s20, 1
      %p172 = por %p170, %p171
      %p173 = scmp.ne.s32.totalorder %s165, %s168
      %p174 = scmp.eq.s32.totalorder %s20, 0
      %p175 = por %p173, %p174
      %p176 = scmp.ne.s32.totalorder %s165, %s168
      %p177 = scmp.eq.s32.totalorder %s25, 1
      %p178 = por %p176, %p177
      %p179 = scmp.ne.s32.totalorder %s168, %s169
      %p180 = scmp.eq.s32.totalorder %s25, 0
      %p181 = por %p179, %p180
      %p182 = scmp.ne.s32.totalorder %s168, %s169
      %p183 = scmp.eq.s32.totalorder %s26, 1
      %p184 = por %p182, %p183
      %p186 = scmp.ne.s32.totalorder %s169, %s185
      %p187 = scmp.eq.s32.totalorder %s26, 0
      %p188 = por %p186, %p187
      %p189 = scmp.le.s32.totalorder 1, %s20
      %p190 = scmp.lt.s32.totalorder %s20, 3
      %p191 = pnand %p189, %p190
      %p192 = pneg %p191
      // Predicated region
      $region9: #{tpu_custom_call.1} parent=5 // pred_check
        _
      $region10: #{tpu_custom_call.1} parent=5 // pred_check_branch
        %194 = sbr.rel (%p191) target = $region12
      $region11: #{tpu_custom_call.1} parent=5 // pred_region
        %s195 = ssub.s32 %s20, 1
        // Predicated region
        $region13: #{tpu_custom_call.1} parent=11 // pred_check
          %p196 = pneg %p53
        $region14: #{tpu_custom_call.1} parent=11 // pred_check_branch
          %198 = sbr.rel (%p196) target = $region16
        $region15: #{tpu_custom_call.1} parent=11 // pred_region
          %s200 = ssub.s32 16, 16
          %201 = vsyncadd [#allocation6], %s200
          %204 = dma.hbm_to_smem %s0, 16, [#allocation3], [#allocation6]
        $region16: #{tpu_custom_call.1} parent=11 // pred_fallthru
          _
      $region12: #{tpu_custom_call.1} parent=5 // pred_fallthru
        _
      %p205 = scmp.lt.s32.totalorder %s20, 2
      // Predicated region
      $region17: #{tpu_custom_call.1} parent=5 // pred_check
        %p206 = pneg %p205
      $region18: #{tpu_custom_call.1} parent=5 // pred_check_branch
        %208 = sbr.rel (%p206) target = $region20
      $region19: #{tpu_custom_call.1} parent=5 // pred_region
        // Predicated region
        $region21: #{tpu_custom_call.1} parent=19 // pred_check
          %p209 = pneg %p75
        $region22: #{tpu_custom_call.1} parent=19 // pred_check_branch
          %211 = sbr.rel (%p209) target = $region24
        $region23: #{tpu_custom_call.1} parent=19 // pred_region
          %s212 = sand.u32 %s65, 1
          %s213 = scalar_lea.sflag [#allocation4], %s212
          %s214 = sand.u32 %s65, 1
          %s215 = smul.addr %s214, 64
          %s216 = scalar_lea.vmem [#allocation7], %s215
          %s217 = smul.u32 2, %s28
          %s219 = ssub.s32 1024, 1024
          %220 = vsyncadd %s213, %s219
          %s221 = smul.addr %s27, 8
          %s222 = sadd.s32 %s217, %s221
          %s223 = smul.addr %s222, 128
          %s224 = scalar_lea.hbm %s1, %s223
          %s225 = sshll.u32 %s216, 4
          %s226 = int_to_ptr.vmem [resolvable:$true] %s225
          %231 = dma.hbm_to_vmem [thread:$0]  %s224, 1024, %s226, %s213, 128, 128, 8
        $region24: #{tpu_custom_call.1} parent=19 // pred_fallthru
          _
        // Predicated region
        $region25: #{tpu_custom_call.1} parent=19 // pred_check
          %p232 = pneg %p111
        $region26: #{tpu_custom_call.1} parent=19 // pred_check_branch
          %234 = sbr.rel (%p232) target = $region28
        $region27: #{tpu_custom_call.1} parent=19 // pred_region
          %s235 = sand.u32 %s20, 1
          %s236 = scalar_lea.sflag [#allocation9], %s235
          %s237 = sand.u32 %s101, 1
          %s238 = smul.addr %s237, 32
          %s239 = scalar_lea.vmem [#allocation8], %s238
          %s240 = smul.u32 %s28, 2
          %s241 = ssub.s32 %s240, 1
          %p242 = scmp.gt.s32.totalorder %s241, 0
          %s243 = scalar_select %p242, %s241, 0
          %s245 = ssub.s32 512, 512
          %246 = vsyncadd %s236, %s245
          %s247 = smul.addr %s27, 8
          %s248 = sadd.s32 %s243, %s247
          %s249 = smul.addr %s248, 128
          %s250 = scalar_lea.hbm %s2, %s249
          %s251 = sshll.u32 %s239, 4
          %s252 = int_to_ptr.vmem [resolvable:$true] %s251
          %257 = dma.hbm_to_vmem [thread:$0]  %s250, 512, %s252, %s236, 256, 128, 8
        $region28: #{tpu_custom_call.1} parent=19 // pred_fallthru
          _
        // Predicated region
        $region29: #{tpu_custom_call.1} parent=19 // pred_check
          %p258 = pneg %p147
        $region30: #{tpu_custom_call.1} parent=19 // pred_check_branch
          %260 = sbr.rel (%p258) target = $region32
        $region31: #{tpu_custom_call.1} parent=19 // pred_region
          %s261 = sand.u32 %s20, 1
          %s262 = scalar_lea.sflag [#allocation9], %s261
          %s263 = sand.u32 %s137, 1
          %s264 = smul.addr %s263, 32
          %s265 = scalar_lea.vmem [#allocation10], %s264
          %s266 = sadd.s32 %s28, 1
          %s267 = smul.u32 %s266, 2
          %p268 = scmp.lt.s32.totalorder %s267, 1
          %s269 = scalar_select %p268, %s267, 1
          %s271 = ssub.s32 512, 512
          %272 = vsyncadd %s262, %s271
          %s273 = smul.addr %s27, 8
          %s274 = sadd.s32 %s269, %s273
          %s275 = smul.addr %s274, 128
          %s276 = scalar_lea.hbm %s3, %s275
          %s277 = sshll.u32 %s265, 4
          %s278 = int_to_ptr.vmem [resolvable:$true] %s277
          %283 = dma.hbm_to_vmem [thread:$0]  %s276, 512, %s278, %s262, 256, 128, 8
        $region32: #{tpu_custom_call.1} parent=19 // pred_fallthru
          _
      $region20: #{tpu_custom_call.1} parent=5 // pred_fallthru
        _
      %p284 = scmp.le.s32.totalorder 1, %s20
      %p285 = scmp.lt.s32.totalorder %s20, 3
      %p286 = pnand %p284, %p285
      %p287 = pneg %p286
      // Predicated region
      $region33: #{tpu_custom_call.1} parent=5 // pred_check
        _
      $region34: #{tpu_custom_call.1} parent=5 // pred_check_branch
        %289 = sbr.rel (%p286) target = $region36
      $region35: #{tpu_custom_call.1} parent=5 // pred_region
        %s290 = ssub.s32 %s20, 1
        // Predicated region
        $region37: #{tpu_custom_call.1} parent=35 // pred_check
          %p291 = pneg %p53
        $region38: #{tpu_custom_call.1} parent=35 // pred_check_branch
          %293 = sbr.rel (%p291) target = $region40
        $region39: #{tpu_custom_call.1} parent=35 // pred_region
          %294 = dma.done [#allocation6], 16
        $region40: #{tpu_custom_call.1} parent=35 // pred_fallthru
          _
        %s295 = sand.u32 %s68, 1
        %s296 = scalar_lea.sflag [#allocation4], %s295
        %s297 = sand.u32 %s68, 1
        %s298 = smul.addr %s297, 64
        %s299 = scalar_lea.vmem [#allocation7], %s298
        // Predicated region
        $region41: #{tpu_custom_call.1} parent=35 // pred_check
          %p300 = pneg %p81
        $region42: #{tpu_custom_call.1} parent=35 // pred_check_branch
          %302 = sbr.rel (%p300) target = $region44
        $region43: #{tpu_custom_call.1} parent=35 // pred_region
          %303 = dma.done %s296, 1024
        $region44: #{tpu_custom_call.1} parent=35 // pred_fallthru
          _
        %s304 = sand.u32 %s25, 1
        %s305 = scalar_lea.sflag [#allocation9], %s304
        %s306 = sand.u32 %s104, 1
        %s307 = smul.addr %s306, 32
        %s308 = scalar_lea.vmem [#allocation8], %s307
        // Predicated region
        $region45: #{tpu_custom_call.1} parent=35 // pred_check
          %p309 = pneg %p117
        $region46: #{tpu_custom_call.1} parent=35 // pred_check_branch
          %311 = sbr.rel (%p309) target = $region48
        $region47: #{tpu_custom_call.1} parent=35 // pred_region
          %312 = dma.done %s305, 512
        $region48: #{tpu_custom_call.1} parent=35 // pred_fallthru
          _
        %s313 = sand.u32 %s25, 1
        %s314 = scalar_lea.sflag [#allocation9], %s313
        %s315 = sand.u32 %s140, 1
        %s316 = smul.addr %s315, 32
        %s317 = scalar_lea.vmem [#allocation10], %s316
        // Predicated region
        $region49: #{tpu_custom_call.1} parent=35 // pred_check
          %p318 = pneg %p153
        $region50: #{tpu_custom_call.1} parent=35 // pred_check_branch
          %320 = sbr.rel (%p318) target = $region52
        $region51: #{tpu_custom_call.1} parent=35 // pred_region
          %321 = dma.done %s314, 512
        $region52: #{tpu_custom_call.1} parent=35 // pred_fallthru
          _
        %322 = sfence
        %p323 = pneg %p53
        %p324 = pneg %p50
        %s325 = sand.u32 %s68, 1
        %s326 = scalar_lea.sflag [#allocation4], %s325
        %s327 = sand.u32 %s68, 1
        %s328 = smul.addr %s327, 64
        %s329 = scalar_lea.vmem [#allocation7], %s328
        %p330 = pneg %p81
        %p331 = pneg %p78
        %s332 = sand.u32 %s25, 1
        %s333 = scalar_lea.sflag [#allocation9], %s332
        %s334 = sand.u32 %s104, 1
        %s335 = smul.addr %s334, 32
        %s336 = scalar_lea.vmem [#allocation8], %s335
        %p337 = pneg %p117
        %p338 = pneg %p114
        %s339 = sand.u32 %s25, 1
        %s340 = scalar_lea.sflag [#allocation9], %s339
        %s341 = sand.u32 %s140, 1
        %s342 = smul.addr %s341, 32
        %s343 = scalar_lea.vmem [#allocation10], %s342
        %p344 = pneg %p153
        %p345 = pneg %p150
        %p346 = pneg %p181
        %p347 = pneg %p178
        %s348 = sand.u32 %s168, 1
        %s349 = scalar_lea.sflag [#allocation5], %s348
        %s350 = sand.u32 %s168, 1
        %s351 = smul.addr %s350, 64
        %s352 = scalar_lea.vmem [#allocation11], %s351
        %s353 = smul.u32 2, %s30
        %s354 = smul.u32 %s30, 2
        %s355 = ssub.s32 %s354, 1
        %p356 = scmp.gt.s32.totalorder %s355, 0
        %s357 = scalar_select %p356, %s355, 0
        %s358 = sadd.s32 %s30, 1
        %s359 = smul.u32 %s358, 2
        %p360 = scmp.lt.s32.totalorder %s359, 1
        %s361 = scalar_select %p360, %s359, 1
        %s362 = smul.u32 2, %s30
        %v363 = vld [vmem:[%s299] sm:$0xff]
        %s364 = sadd.s32 0, 16
        %s365 = scalar_lea.vmem %s299, %s364 [#allocation7]
        %v366 = vld [vmem:[%s365] sm:$0xff]
        %v367 = vadd.f32 %v363, %v366
        %v368 = vmax.f32 %v363, %v366
        %s369 = sadd.s32 0, 32
        %s370 = scalar_lea.vmem %s299, %s369 [#allocation7]
        %v371 = vld [vmem:[%s370] sm:$0xff]
        %v372 = vadd.f32 %v367, %v371
        %v373 = vmax.f32 %v368, %v371
        %s374 = sadd.s32 0, 48
        %s375 = scalar_lea.vmem %s299, %s374 [#allocation7]
        %v376 = vld [vmem:[%s375] sm:$0xff]
        %v377 = vadd.f32 %v372, %v376
        %v378 = vmax.f32 %v373, %v376
        %s379 = scalar_lea.vmem [#allocation2], 8
        %380 = vst [vmem:[%s379] sm:$0xff] %v377
        %s381 = sadd.s32 8, 32
        %s382 = scalar_lea.vmem [#allocation2], %s381
        %383 = vst [vmem:[%s382] sm:$0xff] %v378
        %s384 = scalar_lea.vmem %s299, 8 [#allocation7]
        %v385 = vld [vmem:[%s384] sm:$0xff]
        %s386 = sadd.s32 8, 16
        %s387 = scalar_lea.vmem %s299, %s386 [#allocation7]
        %v388 = vld [vmem:[%s387] sm:$0xff]
        %v389 = vadd.f32 %v385, %v388
        %v390 = vmax.f32 %v385, %v388
        %s391 = scalar_lea.vmem %s299, %s381 [#allocation7]
        %v392 = vld [vmem:[%s391] sm:$0xff]
        %v393 = vadd.f32 %v389, %v392
        %v394 = vmax.f32 %v390, %v392
        %s395 = sadd.s32 8, 48
        %s396 = scalar_lea.vmem %s299, %s395 [#allocation7]
        %v397 = vld [vmem:[%s396] sm:$0xff]
        %v398 = vadd.f32 %v393, %v397
        %v399 = vmax.f32 %v394, %v397
        %s400 = scalar_lea.vmem [#allocation2], 16
        %401 = vst [vmem:[%s400] sm:$0xff] %v398
        %s402 = sadd.s32 16, 32
        %s403 = scalar_lea.vmem [#allocation2], %s402
        %404 = vst [vmem:[%s403] sm:$0xff] %v399
        %v405 = vld [vmem:[%s308] sm:$0xff]
        %s406 = scalar_lea.vmem %s308, 8 [#allocation8]
        %v407 = vld [vmem:[%s406] sm:$0xff]
        %v408 = vadd.f32 %v405, %v407
        %v409 = vmax.f32 %v405, %v407
        %s410 = scalar_lea.vmem %s308, 16 [#allocation8]
        %v411 = vld [vmem:[%s410] sm:$0xff]
        %v412 = vadd.f32 %v408, %v411
        %v413 = vmax.f32 %v409, %v411
        %s414 = scalar_lea.vmem %s308, 24 [#allocation8]
        %v415 = vld [vmem:[%s414] sm:$0xff]
        %v416 = vadd.f32 %v412, %v415
        %v417 = vmax.f32 %v413, %v415
        %418 = vst [vmem:[#allocation2] sm:$0xff] %v416
        %s419 = scalar_lea.vmem [#allocation2], 32
        %420 = vst [vmem:[%s419] sm:$0xff] %v417
        %v421 = vld [vmem:[%s317] sm:$0xff]
        %s422 = scalar_lea.vmem %s317, 8 [#allocation10]
        %v423 = vld [vmem:[%s422] sm:$0xff]
        %v424 = vadd.f32 %v421, %v423
        %v425 = vmax.f32 %v421, %v423
        %s426 = scalar_lea.vmem %s317, 16 [#allocation10]
        %v427 = vld [vmem:[%s426] sm:$0xff]
        %v428 = vadd.f32 %v424, %v427
        %v429 = vmax.f32 %v425, %v427
        %s430 = scalar_lea.vmem %s317, 24 [#allocation10]
        %v431 = vld [vmem:[%s430] sm:$0xff]
        %v432 = vadd.f32 %v428, %v431
        %v433 = vmax.f32 %v429, %v431
        %434 = vst [vmem:[#allocation2 + $0x18] sm:$0xff] %v432
        %435 = vst [vmem:[%s419 + $0x18] sm:$0xff] %v433
        %p436 = scmp.eq.s32.totalorder %s30, 0
        // Predicated region
        $region53: #{tpu_custom_call.1} parent=35 // pred_check
          %p437 = pneg %p436
        $region54: #{tpu_custom_call.1} parent=35 // pred_check_branch
          %439 = sbr.rel (%p437) target = $region56
        $region55: #{tpu_custom_call.1} parent=35 // pred_region
          %440 = vst [vmem:[#allocation2] sm:$0xff] 0.0
          %441 = vst [vmem:[#allocation2 + $0x20] sm:$0xff] 0.0
          %442 = vst [vmem:[#allocation2 + $0x18] sm:$0xff] 0.0
          %443 = vst [vmem:[#allocation2 + $0x38] sm:$0xff] 0.0
        $region56: #{tpu_custom_call.1} parent=35 // pred_fallthru
          _
        %v444 = vld [vmem:[#allocation2 + $0x6] sm:$0xff]
        %v445 = vld [vmem:[#allocation2 + $0xe] sm:$0xff]
        %s446 = sld [smem:[#allocation3]]
        %v447 = vstv %s446
        %v448 = vmul.f32 %v447, %v444
        %v449 = vmul.f32 %v447, %v445
        %s450 = sld [smem:[#allocation3 + $0x1]]
        %v451 = vstv %s450
        %v452 = vmul.f32 %v451, %v444
        %v453 = vmul.f32 %v451, %v445
        %s454 = sld [smem:[#allocation3 + $0x2]]
        %v455 = vstv %s454
        %v456 = vmul.f32 %v455, %v444
        %v457 = vmul.f32 %v455, %v445
        %s458 = sld [smem:[#allocation3 + $0x3]]
        %v459 = vstv %s458
        %v460 = vmul.f32 %v459, %v444
        %v461 = vmul.f32 %v459, %v445
        %s462 = sld [smem:[#allocation3 + $0x4]]
        %v463 = vstv %s462
        %v464 = vmul.f32 %v463, %v444
        %v465 = vmul.f32 %v463, %v445
        %v466 = vld [vmem:[#allocation2 + $0x7] sm:$0xff]
        %v467 = vld [vmem:[#allocation2 + $0xf] sm:$0xff]
        %s468 = sld [smem:[#allocation3 + $0x5]]
        %v469 = vstv %s468
        %v470 = vmul.f32 %v469, %v466
        %v471 = vmul.f32 %v469, %v467
        %v472 = vadd.f32 %v448, %v470
        %v473 = vadd.f32 %v449, %v471
        %s474 = sld [smem:[#allocation3 + $0x6]]
        %v475 = vstv %s474
        %v476 = vmul.f32 %v475, %v466
        %v477 = vmul.f32 %v475, %v467
        %v478 = vadd.f32 %v452, %v476
        %v479 = vadd.f32 %v453, %v477
        %s480 = sld [smem:[#allocation3 + $0x7]]
        %v481 = vstv %s480
        %v482 = vmul.f32 %v481, %v466
        %v483 = vmul.f32 %v481, %v467
        %v484 = vadd.f32 %v456, %v482
        %v485 = vadd.f32 %v457, %v483
        %s486 = sld [smem:[#allocation3 + $0x8]]
        %v487 = vstv %s486
        %v488 = vmul.f32 %v487, %v466
        %v489 = vmul.f32 %v487, %v467
        %v490 = vadd.f32 %v460, %v488
        %v491 = vadd.f32 %v461, %v489
        %s492 = sld [smem:[#allocation3 + $0x9]]
        %v493 = vstv %s492
        %v494 = vmul.f32 %v493, %v466
        %v495 = vmul.f32 %v493, %v467
        %v496 = vadd.f32 %v464, %v494
        %v497 = vadd.f32 %v465, %v495
        %v498 = vld [vmem:[#allocation2 + $0x8] sm:$0xff]
        %v499 = vld [vmem:[#allocation2 + $0x10] sm:$0xff]
        %s500 = sld [smem:[#allocation3 + $0xa]]
        %v501 = vstv %s500
        %v502 = vmul.f32 %v501, %v498
        %v503 = vmul.f32 %v501, %v499
        %v504 = vadd.f32 %v472, %v502
        %v505 = vadd.f32 %v473, %v503
        %s506 = sld [smem:[#allocation3 + $0xb]]
        %v507 = vstv %s506
        %v508 = vmul.f32 %v507, %v498
        %v509 = vmul.f32 %v507, %v499
        %v510 = vadd.f32 %v478, %v508
        %v511 = vadd.f32 %v479, %v509
        %s512 = sld [smem:[#allocation3 + $0xc]]
        %v513 = vstv %s512
        %v514 = vmul.f32 %v513, %v498
        %v515 = vmul.f32 %v513, %v499
        %v516 = vadd.f32 %v484, %v514
        %v517 = vadd.f32 %v485, %v515
        %s518 = sld [smem:[#allocation3 + $0xd]]
        %v519 = vstv %s518
        %v520 = vmul.f32 %v519, %v498
        %v521 = vmul.f32 %v519, %v499
        %v522 = vadd.f32 %v490, %v520
        %v523 = vadd.f32 %v491, %v521
        %s524 = sld [smem:[#allocation3 + $0xe]]
        %v525 = vstv %s524
        %v526 = vmul.f32 %v525, %v498
        %v527 = vmul.f32 %v525, %v499
        %v528 = vadd.f32 %v496, %v526
        %v529 = vadd.f32 %v497, %v527
        %v530 = vld [vmem:[#allocation2 + $0x9] sm:$0xff]
        %v531 = vld [vmem:[#allocation2 + $0x11] sm:$0xff]
        %s532 = sld [smem:[#allocation3 + $0xf]]
        %v533 = vstv %s532
        %v534 = vmul.f32 %v533, %v530
        %v535 = vmul.f32 %v533, %v531
        %v536 = vadd.f32 %v504, %v534
        %v537 = vadd.f32 %v505, %v535
        %s538 = sld [smem:[#allocation3 + $0x10]]
        %v539 = vstv %s538
        %v540 = vmul.f32 %v539, %v530
        %v541 = vmul.f32 %v539, %v531
        %v542 = vadd.f32 %v510, %v540
        %v543 = vadd.f32 %v511, %v541
        %s544 = sld [smem:[#allocation3 + $0x11]]
        %v545 = vstv %s544
        %v546 = vmul.f32 %v545, %v530
        %v547 = vmul.f32 %v545, %v531
        %v548 = vadd.f32 %v516, %v546
        %v549 = vadd.f32 %v517, %v547
        %s550 = sld [smem:[#allocation3 + $0x12]]
        %v551 = vstv %s550
        %v552 = vmul.f32 %v551, %v530
        %v553 = vmul.f32 %v551, %v531
        %v554 = vadd.f32 %v522, %v552
        %v555 = vadd.f32 %v523, %v553
        %s556 = sld [smem:[#allocation3 + $0x13]]
        %v557 = vstv %s556
        %v558 = vmul.f32 %v557, %v530
        %v559 = vmul.f32 %v557, %v531
        %v560 = vadd.f32 %v528, %v558
        %v561 = vadd.f32 %v529, %v559
        %v562 = vld [vmem:[#allocation2 + $0xa] sm:$0xff]
        %v563 = vld [vmem:[#allocation2 + $0x12] sm:$0xff]
        %s564 = sld [smem:[#allocation3 + $0x14]]
        %v565 = vstv %s564
        %v566 = vmul.f32 %v565, %v562
        %v567 = vmul.f32 %v565, %v563
        %v568 = vadd.f32 %v536, %v566
        %v569 = vadd.f32 %v537, %v567
        %s570 = sld [smem:[#allocation3 + $0x15]]
        %v571 = vstv %s570
        %v572 = vmul.f32 %v571, %v562
        %v573 = vmul.f32 %v571, %v563
        %v574 = vadd.f32 %v542, %v572
        %v575 = vadd.f32 %v543, %v573
        %s576 = sld [smem:[#allocation3 + $0x16]]
        %v577 = vstv %s576
        %v578 = vmul.f32 %v577, %v562
        %v579 = vmul.f32 %v577, %v563
        %v580 = vadd.f32 %v548, %v578
        %v581 = vadd.f32 %v549, %v579
        %s582 = sld [smem:[#allocation3 + $0x17]]
        %v583 = vstv %s582
        %v584 = vmul.f32 %v583, %v562
        %v585 = vmul.f32 %v583, %v563
        %v586 = vadd.f32 %v554, %v584
        %v587 = vadd.f32 %v555, %v585
        %s588 = sld [smem:[#allocation3 + $0x18]]
        %v589 = vstv %s588
        %v590 = vmul.f32 %v589, %v562
        %v591 = vmul.f32 %v589, %v563
        %v592 = vadd.f32 %v560, %v590
        %v593 = vadd.f32 %v561, %v591
        %v594 = vld [vmem:[%s419 + $0x6] sm:$0xff]
        %v595 = vld [vmem:[%s419 + $0xe] sm:$0xff]
        %s596 = sld [smem:[#allocation3 + $0x19]]
        %v597 = vstv %s596
        %v598 = vmul.f32 %v597, %v594
        %v599 = vmul.f32 %v597, %v595
        %v600 = vadd.f32 %v568, %v598
        %v601 = vadd.f32 %v569, %v599
        %s602 = sld [smem:[#allocation3 + $0x1a]]
        %v603 = vstv %s602
        %v604 = vmul.f32 %v603, %v594
        %v605 = vmul.f32 %v603, %v595
        %v606 = vadd.f32 %v574, %v604
        %v607 = vadd.f32 %v575, %v605
        %s608 = sld [smem:[#allocation3 + $0x1b]]
        %v609 = vstv %s608
        %v610 = vmul.f32 %v609, %v594
        %v611 = vmul.f32 %v609, %v595
        %v612 = vadd.f32 %v580, %v610
        %v613 = vadd.f32 %v581, %v611
        %s614 = sld [smem:[#allocation3 + $0x1c]]
        %v615 = vstv %s614
        %v616 = vmul.f32 %v615, %v594
        %v617 = vmul.f32 %v615, %v595
        %v618 = vadd.f32 %v586, %v616
        %v619 = vadd.f32 %v587, %v617
        %s620 = sld [smem:[#allocation3 + $0x1d]]
        %v621 = vstv %s620
        %v622 = vmul.f32 %v621, %v594
        %v623 = vmul.f32 %v621, %v595
        %v624 = vadd.f32 %v592, %v622
        %v625 = vadd.f32 %v593, %v623
        %v626 = vld [vmem:[%s419 + $0x7] sm:$0xff]
        %v627 = vld [vmem:[%s419 + $0xf] sm:$0xff]
        %s628 = sld [smem:[#allocation3 + $0x1e]]
        %v629 = vstv %s628
        %v630 = vmul.f32 %v629, %v626
        %v631 = vmul.f32 %v629, %v627
        %v632 = vadd.f32 %v600, %v630
        %v633 = vadd.f32 %v601, %v631
        %s634 = sld [smem:[#allocation3 + $0x1f]]
        %v635 = vstv %s634
        %v636 = vmul.f32 %v635, %v626
        %v637 = vmul.f32 %v635, %v627
        %v638 = vadd.f32 %v606, %v636
        %v639 = vadd.f32 %v607, %v637
        %s640 = sld [smem:[#allocation3 + $0x20]]
        %v641 = vstv %s640
        %v642 = vmul.f32 %v641, %v626
        %v643 = vmul.f32 %v641, %v627
        %v644 = vadd.f32 %v612, %v642
        %v645 = vadd.f32 %v613, %v643
        %s646 = sld [smem:[#allocation3 + $0x21]]
        %v647 = vstv %s646
        %v648 = vmul.f32 %v647, %v626
        %v649 = vmul.f32 %v647, %v627
        %v650 = vadd.f32 %v618, %v648
        %v651 = vadd.f32 %v619, %v649
        %s652 = sld [smem:[#allocation3 + $0x22]]
        %v653 = vstv %s652
        %v654 = vmul.f32 %v653, %v626
        %v655 = vmul.f32 %v653, %v627
        %v656 = vadd.f32 %v624, %v654
        %v657 = vadd.f32 %v625, %v655
        %v658 = vld [vmem:[%s419 + $0x8] sm:$0xff]
        %v659 = vld [vmem:[%s419 + $0x10] sm:$0xff]
        %s660 = sld [smem:[#allocation3 + $0x23]]
        %v661 = vstv %s660
        %v662 = vmul.f32 %v661, %v658
        %v663 = vmul.f32 %v661, %v659
        %v664 = vadd.f32 %v632, %v662
        %v665 = vadd.f32 %v633, %v663
        %s666 = sld [smem:[#allocation3 + $0x24]]
        %v667 = vstv %s666
        %v668 = vmul.f32 %v667, %v658
        %v669 = vmul.f32 %v667, %v659
        %v670 = vadd.f32 %v638, %v668
        %v671 = vadd.f32 %v639, %v669
        %s672 = sld [smem:[#allocation3 + $0x25]]
        %v673 = vstv %s672
        %v674 = vmul.f32 %v673, %v658
        %v675 = vmul.f32 %v673, %v659
        %v676 = vadd.f32 %v644, %v674
        %v677 = vadd.f32 %v645, %v675
        %s678 = sld [smem:[#allocation3 + $0x26]]
        %v679 = vstv %s678
        %v680 = vmul.f32 %v679, %v658
        %v681 = vmul.f32 %v679, %v659
        %v682 = vadd.f32 %v650, %v680
        %v683 = vadd.f32 %v651, %v681
        %s684 = sld [smem:[#allocation3 + $0x27]]
        %v685 = vstv %s684
        %v686 = vmul.f32 %v685, %v658
        %v687 = vmul.f32 %v685, %v659
        %v688 = vadd.f32 %v656, %v686
        %v689 = vadd.f32 %v657, %v687
        %v690 = vld [vmem:[%s419 + $0x9] sm:$0xff]
        %v691 = vld [vmem:[%s419 + $0x11] sm:$0xff]
        %s692 = sld [smem:[#allocation3 + $0x28]]
        %v693 = vstv %s692
        %v694 = vmul.f32 %v693, %v690
        %v695 = vmul.f32 %v693, %v691
        %v696 = vadd.f32 %v664, %v694
        %v697 = vadd.f32 %v665, %v695
        %s698 = sld [smem:[#allocation3 + $0x29]]
        %v699 = vstv %s698
        %v700 = vmul.f32 %v699, %v690
        %v701 = vmul.f32 %v699, %v691
        %v702 = vadd.f32 %v670, %v700
        %v703 = vadd.f32 %v671, %v701
        %s704 = sld [smem:[#allocation3 + $0x2a]]
        %v705 = vstv %s704
        %v706 = vmul.f32 %v705, %v690
        %v707 = vmul.f32 %v705, %v691
        %v708 = vadd.f32 %v676, %v706
        %v709 = vadd.f32 %v677, %v707
        %s710 = sld [smem:[#allocation3 + $0x2b]]
        %v711 = vstv %s710
        %v712 = vmul.f32 %v711, %v690
        %v713 = vmul.f32 %v711, %v691
        %v714 = vadd.f32 %v682, %v712
        %v715 = vadd.f32 %v683, %v713
        %s716 = sld [smem:[#allocation3 + $0x2c]]
        %v717 = vstv %s716
        %v718 = vmul.f32 %v717, %v690
        %v719 = vmul.f32 %v717, %v691
        %v720 = vadd.f32 %v688, %v718
        %v721 = vadd.f32 %v689, %v719
        %v722 = vld [vmem:[%s419 + $0xa] sm:$0xff]
        %v723 = vld [vmem:[%s419 + $0x12] sm:$0xff]
        %s724 = sld [smem:[#allocation3 + $0x2d]]
        %v725 = vstv %s724
        %v726 = vmul.f32 %v725, %v722
        %v727 = vmul.f32 %v725, %v723
        %v728 = vadd.f32 %v696, %v726
        %v729 = vadd.f32 %v697, %v727
        %s730 = sld [smem:[#allocation3 + $0x2e]]
        %v731 = vstv %s730
        %v732 = vmul.f32 %v731, %v722
        %v733 = vmul.f32 %v731, %v723
        %v734 = vadd.f32 %v702, %v732
        %v735 = vadd.f32 %v703, %v733
        %s736 = sld [smem:[#allocation3 + $0x2f]]
        %v737 = vstv %s736
        %v738 = vmul.f32 %v737, %v722
        %v739 = vmul.f32 %v737, %v723
        %v740 = vadd.f32 %v708, %v738
        %v741 = vadd.f32 %v709, %v739
        %s742 = sld [smem:[#allocation3 + $0x30]]
        %v743 = vstv %s742
        %v744 = vmul.f32 %v743, %v722
        %v745 = vmul.f32 %v743, %v723
        %v746 = vadd.f32 %v714, %v744
        %v747 = vadd.f32 %v715, %v745
        %s748 = sld [smem:[#allocation3 + $0x31]]
        %v749 = vstv %s748
        %v750 = vmul.f32 %v749, %v722
        %v751 = vmul.f32 %v749, %v723
        %v752 = vadd.f32 %v720, %v750
        %v753 = vadd.f32 %v721, %v751
        %754 = vrot.lane.b32.xlu0 %v728, 2
        %v755 = vpop.permute.xlu0 %754
        %756 = vrot.lane.b32.xlu0 %v729, 2
        %v757 = vpop.permute.xlu0 %756
        %v758 = vadd.f32 %v740, %v755
        %v759 = vadd.f32 %v741, %v757
        %760 = vrot.lane.b32.xlu0 %v734, 1
        %v761 = vpop.permute.xlu0 %760
        %762 = vrot.lane.b32.xlu0 %v735, 1
        %v763 = vpop.permute.xlu0 %762
        %v764 = vadd.f32 %v758, %v761
        %v765 = vadd.f32 %v759, %v763
        %766 = vrot.lane.b32.xlu0 %v746, 127
        %v767 = vpop.permute.xlu0 %766
        %768 = vrot.lane.b32.xlu0 %v747, 127
        %v769 = vpop.permute.xlu0 %768
        %v770 = vadd.f32 %v764, %v767
        %v771 = vadd.f32 %v765, %v769
        %772 = vrot.lane.b32.xlu0 %v752, 126
        %v773 = vpop.permute.xlu0 %772
        %774 = vrot.lane.b32.xlu0 %v753, 126
        %v775 = vpop.permute.xlu0 %774
        %v776 = vadd.f32 %v770, %v773
        %v777 = vadd.f32 %v771, %v775
        %v778 = vxor.u32 %v776, 2147483648
        %v779 = vxor.u32 %v777, 2147483648
        %v780 = vmul.f32 %v778, 1.442695
        %v781 = vpow.pop %v780
        %v782 = vmul.f32 %v779, 1.442695
        %v783 = vpow.pop %v782
        %v784 = vadd.f32 %v781, 1.0
        %v785 = vadd.f32 %v783, 1.0
        %v786 = vrcp.pop %v784
        %v787 = vmul.f32 1.0, %v786
        %v788 = vrcp.pop %v785
        %v789 = vmul.f32 1.0, %v788
        %v790 = vld [vmem:[%s299] sm:$0xff]
        %v791 = vld [vmem:[%s299 + $0x8] sm:$0xff]
        %v792 = vmul.f32 %v787, %v790
        %v793 = vmul.f32 %v789, %v791
        %794 = vst [vmem:[%s352] sm:$0xff] %v792
        %795 = vst [vmem:[%s352 + $0x8] sm:$0xff] %v793
        %s796 = scalar_lea.vmem %s299, 16 [#allocation7]
        %v797 = vld [vmem:[%s796] sm:$0xff]
        %v798 = vld [vmem:[%s796 + $0x8] sm:$0xff]
        %v799 = vmul.f32 %v787, %v797
        %v800 = vmul.f32 %v789, %v798
        %s801 = scalar_lea.vmem %s352, 16 [#allocation11]
        %802 = vst [vmem:[%s801] sm:$0xff] %v799
        %803 = vst [vmem:[%s801 + $0x8] sm:$0xff] %v800
        %s804 = scalar_lea.vmem %s299, 32 [#allocation7]
        %v805 = vld [vmem:[%s804] sm:$0xff]
        %v806 = vld [vmem:[%s804 + $0x8] sm:$0xff]
        %v807 = vmul.f32 %v787, %v805
        %v808 = vmul.f32 %v789, %v806
        %s809 = scalar_lea.vmem %s352, 32 [#allocation11]
        %810 = vst [vmem:[%s809] sm:$0xff] %v807
        %811 = vst [vmem:[%s809 + $0x8] sm:$0xff] %v808
        %s812 = scalar_lea.vmem %s299, 48 [#allocation7]
        %v813 = vld [vmem:[%s812] sm:$0xff]
        %v814 = vld [vmem:[%s812 + $0x8] sm:$0xff]
        %v815 = vmul.f32 %v787, %v813
        %v816 = vmul.f32 %v789, %v814
        %s817 = scalar_lea.vmem %s352, 48 [#allocation11]
        %818 = vst [vmem:[%s817] sm:$0xff] %v815
        %819 = vst [vmem:[%s817 + $0x8] sm:$0xff] %v816
        %s820 = sand.u32 %s168, 1
        %s821 = scalar_lea.sflag [#allocation5], %s820
        %s822 = sand.u32 %s168, 1
        %s823 = smul.addr %s822, 64
        %s824 = scalar_lea.vmem [#allocation11], %s823
        // Predicated region
        $region57: #{tpu_custom_call.1} parent=35 // pred_check
          %p825 = pneg %p178
        $region58: #{tpu_custom_call.1} parent=35 // pred_check_branch
          %827 = sbr.rel (%p825) target = $region60
        $region59: #{tpu_custom_call.1} parent=35 // pred_region
          %s828 = smul.u32 2, %s30
          %s830 = ssub.s32 1024, 1024
          %831 = vsyncadd %s821, %s830
          %s832 = smul.addr %s29, 8
          %s833 = sadd.s32 %s828, %s832
          %s834 = smul.addr %s833, 128
          %s835 = scalar_lea.hbm %s4, %s834
          %s836 = sshll.u32 %s824, 4
          %s837 = int_to_ptr.vmem [resolvable:$true] %s836
          %842 = dma.vmem_to_hbm [thread:$0]  %s837, 1024, %s835, %s821, 128, 128, 8
        $region60: #{tpu_custom_call.1} parent=35 // pred_fallthru
          _
      $region36: #{tpu_custom_call.1} parent=5 // pred_fallthru
        _
      %p843 = scmp.le.s32.totalorder 2, %s20
      // Predicated region
      $region61: #{tpu_custom_call.1} parent=5 // pred_check
        %p844 = pneg %p843
      $region62: #{tpu_custom_call.1} parent=5 // pred_check_branch
        %846 = sbr.rel (%p844) target = $region64
      $region63: #{tpu_custom_call.1} parent=5 // pred_region
        %s847 = ssub.s32 %s20, 2
        // Predicated region
        $region65: #{tpu_custom_call.1} parent=63 // pred_check
          %p848 = pneg %p184
        $region66: #{tpu_custom_call.1} parent=63 // pred_check_branch
          %850 = sbr.rel (%p848) target = $region68
        $region67: #{tpu_custom_call.1} parent=63 // pred_region
          %s851 = sand.u32 %s169, 1
          %s852 = scalar_lea.sflag [#allocation5], %s851
          %s853 = sand.u32 %s169, 1
          %s854 = smul.addr %s853, 64
          %s855 = scalar_lea.vmem [#allocation11], %s854
          %856 = dma.done %s852, 1024
        $region68: #{tpu_custom_call.1} parent=63 // pred_fallthru
          _
      $region64: #{tpu_custom_call.1} parent=5 // pred_fallthru
        _
    $region6: #{tpu_custom_call.1} parent=1 // loop_footer
      %s24 = sadd.s32 1, %s20
    $region7: #{tpu_custom_call.1} parent=1 // loop_footer_branch
      %19 = sbr.rel target = $region3
    $region8: #{tpu_custom_call.1} parent=1 // loop_exit
      _
    %857 = vsyncpa [#allocation4], 1
    %s858 = scalar_lea.sflag [#allocation4], 1
    %859 = vsyncpa %s858, 1
    %860 = vsyncpa [#allocation9], 1
    %s861 = scalar_lea.sflag [#allocation9], 1
    %862 = vsyncpa %s861, 1
    %863 = vsyncpa [#allocation5], 1
    %s864 = scalar_lea.sflag [#allocation5], 1
    %865 = vsyncpa %s864, 1
    %866 = vsyncpa [#allocation6], 1
    %s867 = scalar_lea.sflag [#allocation6], 1
    %868 = vsyncpa %s867, 1

</llo_original>
